<compile_context>
chip_gen: v7x
topology: tpu7x:2x2x1
jax: 0.10.0
libtpu: 0.0.40
codegen_flags: <defaults>
</compile_context>

<pallas_src>
import jax
import jax.numpy as jnp
import numpy as np
from jax import lax
from jax.experimental import pallas as pl
from jax.experimental.pallas import tpu as pltpu

LANE = 128


def _ib_kernel(x_ref, w1_ref, b1_ref, w2_ref, b2_ref, w3_ref, b3_ref,
               w4_ref, b4_ref, o_ref, pad_ref):
    # x_ref : (1, H, W, Cp)   f32   input, channels zero-padded to Cp
    # w1_ref: (Cp, Ip)        bf16  1x1 conv, BN1 scale folded in
    # b1_ref: (1, Ip)         f32
    # w2_ref: (9, Ip)         f32   depthwise 3x3 taps, BN2 scale folded in
    # b2_ref: (1, Ip)         f32
    # w3_ref: (Ip, Ip)        bf16  1x1 conv, BN3 scale folded in
    # b3_ref: (1, Ip)         f32
    # w4_ref: (Ip, Cp)        bf16  1x1 conv, BN4 scale folded in
    # b4_ref: (1, Cp)         f32
    # o_ref : (1, H, W, Cp)   f32
    # pad_ref: (H+2, W+2, Ip) f32   VMEM scratch holding the zero-padded halo
    _, H, W, Cp = x_ref.shape
    Ip = w1_ref.shape[1]

    x = x_ref[0]                                    # (H, W, Cp) f32
    x2d = x.reshape(H * W, Cp)

    # ---- Stage 1: 1x1 conv + BN1 (folded) + ReLU -------------------------
    h = jnp.dot(x2d.astype(jnp.bfloat16), w1_ref[...],
                preferred_element_type=jnp.float32)          # (H*W, Ip)
    h = jnp.maximum(h + b1_ref[...], 0.0)

    # ---- Stage 2: depthwise 3x3, padding=1 + BN2 (folded) + ReLU ---------
    pad_ref[...] = jnp.zeros(pad_ref.shape, dtype=pad_ref.dtype)
    pad_ref[pl.ds(1, H), pl.ds(1, W), :] = h.reshape(H, W, Ip)
    w2 = w2_ref[...]                                # (9, Ip) f32
    acc = jnp.zeros((H, W, Ip), dtype=jnp.float32)
    for kh in range(3):
        for kw in range(3):
            kk = kh * 3 + kw
            tap = w2[kk:kk + 1, :]                  # (1, Ip), static slice
            acc = acc + pad_ref[pl.ds(kh, H), pl.ds(kw, W), :] * tap
    h = jnp.maximum(acc.reshape(H * W, Ip) + b2_ref[...], 0.0)

    # ---- Stage 3: 1x1 conv + BN3 (folded) + ReLU -------------------------
    h = jnp.dot(h.astype(jnp.bfloat16), w3_ref[...],
                preferred_element_type=jnp.float32)
    h = jnp.maximum(h + b3_ref[...], 0.0)

    # ---- Stage 4: 1x1 conv + BN4 (folded) + residual add -----------------
    y = jnp.dot(h.astype(jnp.bfloat16), w4_ref[...],
                preferred_element_type=jnp.float32)
    y = y + b4_ref[...] + x2d
    o_ref[0] = y.reshape(H, W, Cp).astype(o_ref.dtype)


def _round_up(n, m=LANE):
    return ((n + m - 1) // m) * m


def _pad2d(a, rows, cols, dtype):
    out = jnp.zeros((rows, cols), dtype=dtype)
    return out.at[:a.shape[0], :a.shape[1]].set(a.astype(dtype))


def inverted_bottleneck_forward(x_nchw, params, eps=1e-5):
    (w1, g1, be1, m1, v1,
     w2, g2, be2, m2, v2,
     w3, g3, be3, m3, v3,
     w4, g4, be4, m4, v4) = params

    n, cin, h, w = x_nchw.shape
    cinter = w1.shape[0]
    cp = _round_up(cin)
    ip = _round_up(cinter)

    # Fold eval-mode BN into conv weights (scale) + per-output-channel bias.
    s1 = g1 / jnp.sqrt(v1 + eps); bias1 = be1 - m1 * s1
    s2 = g2 / jnp.sqrt(v2 + eps); bias2 = be2 - m2 * s2
    s3 = g3 / jnp.sqrt(v3 + eps); bias3 = be3 - m3 * s3
    s4 = g4 / jnp.sqrt(v4 + eps); bias4 = be4 - m4 * s4

    w1_eff = (w1[:, :, 0, 0] * s1[:, None]).T                     # (cin, cinter)
    w2_eff = jnp.transpose(w2[:, 0, :, :] * s2[:, None, None],
                           (1, 2, 0)).reshape(9, cinter)          # (9, cinter)
    w3_eff = (w3[:, :, 0, 0] * s3[:, None]).T                     # (cinter, cinter)
    w4_eff = (w4[:, :, 0, 0] * s4[:, None]).T                     # (cinter, cin)

    w1p = _pad2d(w1_eff, cp, ip, jnp.bfloat16)
    w2p = _pad2d(w2_eff, 9, ip, jnp.float32)
    w3p = _pad2d(w3_eff, ip, ip, jnp.bfloat16)
    w4p = _pad2d(w4_eff, ip, cp, jnp.bfloat16)
    b1p = _pad2d(bias1.reshape(1, -1), 1, ip, jnp.float32)
    b2p = _pad2d(bias2.reshape(1, -1), 1, ip, jnp.float32)
    b3p = _pad2d(bias3.reshape(1, -1), 1, ip, jnp.float32)
    b4p = _pad2d(bias4.reshape(1, -1), 1, cp, jnp.float32)

    # NCHW -> NHWC, zero-pad channels to the lane width (lane-dense loads/stores).
    x_nhwc = jnp.transpose(x_nchw, (0, 2, 3, 1)).astype(jnp.float32)
    x_pad = jnp.pad(x_nhwc, ((0, 0), (0, 0), (0, 0), (0, cp - cin)))

    flops = 2 * n * h * w * (cp * ip + 9 * ip + ip * ip + ip * cp)
    bytes_accessed = ((x_pad.size + n * h * w * cp) * 4
                      + (w1p.size + w3p.size + w4p.size) * 2
                      + (w2p.size + b1p.size + b2p.size + b3p.size + b4p.size) * 4)

    out_nhwc = pl.pallas_call(
        _ib_kernel,
        out_shape=jax.ShapeDtypeStruct((n, h, w, cp), jnp.float32),
        grid_spec=pltpu.PrefetchScalarGridSpec(
            num_scalar_prefetch=0,
            grid=(n,),
            in_specs=[
                pl.BlockSpec((1, h, w, cp), lambda b: (b, 0, 0, 0)),
                pl.BlockSpec((cp, ip), lambda b: (0, 0)),
                pl.BlockSpec((1, ip), lambda b: (0, 0)),
                pl.BlockSpec((9, ip), lambda b: (0, 0)),
                pl.BlockSpec((1, ip), lambda b: (0, 0)),
                pl.BlockSpec((ip, ip), lambda b: (0, 0)),
                pl.BlockSpec((1, ip), lambda b: (0, 0)),
                pl.BlockSpec((ip, cp), lambda b: (0, 0)),
                pl.BlockSpec((1, cp), lambda b: (0, 0)),
            ],
            out_specs=pl.BlockSpec((1, h, w, cp), lambda b: (b, 0, 0, 0)),
            scratch_shapes=[pltpu.VMEM((h + 2, w + 2, ip), jnp.float32)],
        ),
        compiler_params=pltpu.CompilerParams(
            dimension_semantics=("parallel",),
            vmem_limit_bytes=32 * 1024 * 1024),
        cost_estimate=pl.CostEstimate(flops=flops, transcendentals=0,
                                      bytes_accessed=bytes_accessed),
    )(x_pad, w1p, b1p, w2p, b2p, w3p, b3p, w4p, b4p)

    # Slice off channel padding, NHWC -> NCHW (PyTorch convention).
    return jnp.transpose(out_nhwc[:, :, :, :cin], (0, 3, 1, 2))


def _reference(x, params, eps=1e-5):
    (w1, g1, be1, m1, v1,
     w2, g2, be2, m2, v2,
     w3, g3, be3, m3, v3,
     w4, g4, be4, m4, v4) = params
    cinter = w1.shape[0]

    def conv(x, w, pad, groups=1):
        return lax.conv_general_dilated(
            x, w, window_strides=(1, 1),
            padding=[(pad, pad), (pad, pad)],
            dimension_numbers=("NCHW", "OIHW", "NCHW"),
            feature_group_count=groups)

    def bn(x, g, b, m, v):
        s = (g / jnp.sqrt(v + eps)).reshape(1, -1, 1, 1)
        bb = (b - m * g / jnp.sqrt(v + eps)).reshape(1, -1, 1, 1)
        return x * s + bb

    h = jnp.maximum(bn(conv(x, w1, 0), g1, be1, m1, v1), 0.0)
    h = jnp.maximum(bn(conv(h, w2, 1, groups=cinter), g2, be2, m2, v2), 0.0)
    h = jnp.maximum(bn(conv(h, w3, 0), g3, be3, m3, v3), 0.0)
    y = bn(conv(h, w4, 0), g4, be4, m4, v4)
    return y + x


if __name__ == "__main__":
    key = jax.random.PRNGKey(0)
    keys = jax.random.split(key, 21)

    N, CIN, H, W = 2, 4, 16, 16
    CINTER = 8

    x = jax.random.normal(keys[0], (N, CIN, H, W), dtype=jnp.float32)

    def bn_params(kg, kb, km, kv, c):
        gamma = 1.0 + 0.1 * jax.random.normal(kg, (c,), dtype=jnp.float32)
        beta = 0.1 * jax.random.normal(kb, (c,), dtype=jnp.float32)
        mean = 0.1 * jax.random.normal(km, (c,), dtype=jnp.float32)
        var = jnp.abs(jax.random.normal(kv, (c,), dtype=jnp.float32)) + 0.5
        return gamma, beta, mean, var

    w1 = 0.1 * jax.random.normal(keys[1], (CINTER, CIN, 1, 1), dtype=jnp.float32)
    g1, be1, m1, v1 = bn_params(keys[2], keys[3], keys[4], keys[5], CINTER)
    w2 = 0.1 * jax.random.normal(keys[6], (CINTER, 1, 3, 3), dtype=jnp.float32)
    g2, be2, m2, v2 = bn_params(keys[7], keys[8], keys[9], keys[10], CINTER)
    w3 = 0.1 * jax.random.normal(keys[11], (CINTER, CINTER, 1, 1), dtype=jnp.float32)
    g3, be3, m3, v3 = bn_params(keys[12], keys[13], keys[14], keys[15], CINTER)
    w4 = 0.1 * jax.random.normal(keys[16], (CIN, CINTER, 1, 1), dtype=jnp.float32)
    g4, be4, m4, v4 = bn_params(keys[17], keys[18], keys[19], keys[20], CIN)

    params = (w1, g1, be1, m1, v1,
              w2, g2, be2, m2, v2,
              w3, g3, be3, m3, v3,
              w4, g4, be4, m4, v4)

    out = inverted_bottleneck_forward(x, params)
    out = jax.block_until_ready(out)

    ref = _reference(x, params)
    assert out.shape == (N, CIN, H, W), out.shape
    # bf16 MXU inputs with f32 accumulation: tolerance loosened vs the f32 reference.
    err = np.max(np.abs(np.asarray(out) - np.asarray(ref)))
    assert np.allclose(np.asarray(out), np.asarray(ref), atol=2e-2, rtol=2e-2), err

    print("KERNEL_OK")
</pallas_src>

<mosaic_0001>
module attributes {stable_mosaic.version = 11 : i64} {
  func.func @_ib_kernel(%arg0: i32, %arg1: memref<1x16x16x128xf32, #tpu.memory_space<vmem>>, %arg2: memref<128x128xbf16, #tpu.memory_space<vmem>>, %arg3: memref<1x128xf32, #tpu.memory_space<vmem>>, %arg4: memref<9x128xf32, #tpu.memory_space<vmem>>, %arg5: memref<1x128xf32, #tpu.memory_space<vmem>>, %arg6: memref<128x128xbf16, #tpu.memory_space<vmem>>, %arg7: memref<1x128xf32, #tpu.memory_space<vmem>>, %arg8: memref<128x128xbf16, #tpu.memory_space<vmem>>, %arg9: memref<1x128xf32, #tpu.memory_space<vmem>>, %arg10: memref<1x16x16x128xf32, #tpu.memory_space<vmem>>, %arg11: memref<18x18x128xf32, #tpu.memory_space<vmem>>) attributes {dimension_semantics = [#tpu.dimension_semantics<parallel>], iteration_bounds = array<i64: 2>, scalar_prefetch = 0 : i64, scratch_operands = 1 : i64, tpu.core_type = #tpu.core_type<tc>, window_params = [{transform_indices = @transform_0, window_bounds = array<i64: 1, 16, 16, 128>}, {pipeline_mode = #tpu.pipeline_mode<synchronous>, transform_indices = @transform_1, window_bounds = array<i64: 128, 128>}, {pipeline_mode = #tpu.pipeline_mode<synchronous>, transform_indices = @transform_2, window_bounds = array<i64: 1, 128>}, {pipeline_mode = #tpu.pipeline_mode<synchronous>, transform_indices = @transform_3, window_bounds = array<i64: 9, 128>}, {pipeline_mode = #tpu.pipeline_mode<synchronous>, transform_indices = @transform_4, window_bounds = array<i64: 1, 128>}, {pipeline_mode = #tpu.pipeline_mode<synchronous>, transform_indices = @transform_5, window_bounds = array<i64: 128, 128>}, {pipeline_mode = #tpu.pipeline_mode<synchronous>, transform_indices = @transform_6, window_bounds = array<i64: 1, 128>}, {pipeline_mode = #tpu.pipeline_mode<synchronous>, transform_indices = @transform_7, window_bounds = array<i64: 128, 128>}, {pipeline_mode = #tpu.pipeline_mode<synchronous>, transform_indices = @transform_8, window_bounds = array<i64: 1, 128>}, {transform_indices = @transform_9, window_bounds = array<i64: 1, 16, 16, 128>}]} {
    %c0 = arith.constant 0 : index
    %c0_0 = arith.constant 0 : index
    %c0_1 = arith.constant 0 : index
    %c0_2 = arith.constant 0 : index
    %0 = vector.load %arg1[%c0, %c0_0, %c0_1, %c0_2] : memref<1x16x16x128xf32, #tpu.memory_space<vmem>>, vector<1x16x16x128xf32>
    %1 = vector.shape_cast %0 : vector<1x16x16x128xf32> to vector<16x16x128xf32>
    %2 = vector.shape_cast %1 : vector<16x16x128xf32> to vector<256x128xf32>
    %3 = arith.truncf %2 : vector<256x128xf32> to vector<256x128xbf16>
    %c0_3 = arith.constant 0 : index
    %c0_4 = arith.constant 0 : index
    %4 = vector.load %arg2[%c0_3, %c0_4] : memref<128x128xbf16, #tpu.memory_space<vmem>>, vector<128x128xbf16>
    %cst = arith.constant dense<0.000000e+00> : vector<256x128xf32>
    %5 = tpu.matmul %3, %4, %cst {dimension_numbers = #tpu.dot_dimension_numbers<[1], [0], [0], [1], [0, 0, 1, 1], [], []>} : vector<256x128xbf16>, vector<128x128xbf16>, vector<256x128xf32> -> vector<256x128xf32>
    %c0_5 = arith.constant 0 : index
    %c0_6 = arith.constant 0 : index
    %6 = vector.load %arg3[%c0_5, %c0_6] : memref<1x128xf32, #tpu.memory_space<vmem>>, vector<1x128xf32>
    %7 = vector.broadcast %6 : vector<1x128xf32> to vector<256x128xf32>
    %8 = arith.addf %5, %7 : vector<256x128xf32>
    %cst_7 = arith.constant 0.000000e+00 : f32
    %9 = vector.broadcast %cst_7 : f32 to vector<256x128xf32>
    %10 = arith.maximumf %8, %9 : vector<256x128xf32>
    %cst_8 = arith.constant 0.000000e+00 : f32
    %11 = vector.broadcast %cst_8 : f32 to vector<18x18x128xf32>
    %c0_9 = arith.constant 0 : index
    %c0_10 = arith.constant 0 : index
    %c0_11 = arith.constant 0 : index
    %12 = vector.load %arg11[%c0_9, %c0_10, %c0_11] : memref<18x18x128xf32, #tpu.memory_space<vmem>>, vector<18x18x128xf32>
    tpu.vector_store %arg11[%c0_9, %c0_10, %c0_11], %11 {strides = array<i32>} : memref<18x18x128xf32, #tpu.memory_space<vmem>>, vector<18x18x128xf32>,
    %13 = vector.shape_cast %10 : vector<256x128xf32> to vector<16x16x128xf32>
    %c1 = arith.constant 1 : index
    %c1_12 = arith.constant 1 : index
    %c0_13 = arith.constant 0 : index
    %14 = vector.load %arg11[%c1, %c1_12, %c0_13] : memref<18x18x128xf32, #tpu.memory_space<vmem>>, vector<16x16x128xf32>
    tpu.vector_store %arg11[%c1, %c1_12, %c0_13], %13 {strides = array<i32>} : memref<18x18x128xf32, #tpu.memory_space<vmem>>, vector<16x16x128xf32>,
    %c0_14 = arith.constant 0 : index
    %c0_15 = arith.constant 0 : index
    %15 = vector.load %arg4[%c0_14, %c0_15] : memref<9x128xf32, #tpu.memory_space<vmem>>, vector<9x128xf32>
    %cst_16 = arith.constant 0.000000e+00 : f32
    %16 = vector.broadcast %cst_16 : f32 to vector<16x16x128xf32>
    %17 = vector.extract_strided_slice %15 {offsets = [0, 0], sizes = [1, 128], strides = [1, 1]} : vector<9x128xf32> to vector<1x128xf32>
    %c0_17 = arith.constant 0 : index
    %c0_18 = arith.constant 0 : index
    %c0_19 = arith.constant 0 : index
    %18 = vector.load %arg11[%c0_17, %c0_18, %c0_19] : memref<18x18x128xf32, #tpu.memory_space<vmem>>, vector<16x16x128xf32>
    %19 = vector.shape_cast %17 : vector<1x128xf32> to vector<1x1x128xf32>
    %20 = vector.broadcast %19 : vector<1x1x128xf32> to vector<16x16x128xf32>
    %21 = arith.mulf %18, %20 : vector<16x16x128xf32>
    %22 = arith.addf %16, %21 : vector<16x16x128xf32>
    %23 = vector.extract_strided_slice %15 {offsets = [1, 0], sizes = [1, 128], strides = [1, 1]} : vector<9x128xf32> to vector<1x128xf32>
    %c0_20 = arith.constant 0 : index
    %c1_21 = arith.constant 1 : index
    %c0_22 = arith.constant 0 : index
    %24 = vector.load %arg11[%c0_20, %c1_21, %c0_22] : memref<18x18x128xf32, #tpu.memory_space<vmem>>, vector<16x16x128xf32>
    %25 = vector.shape_cast %23 : vector<1x128xf32> to vector<1x1x128xf32>
    %26 = vector.broadcast %25 : vector<1x1x128xf32> to vector<16x16x128xf32>
    %27 = arith.mulf %24, %26 : vector<16x16x128xf32>
    %28 = arith.addf %22, %27 : vector<16x16x128xf32>
    %29 = vector.extract_strided_slice %15 {offsets = [2, 0], sizes = [1, 128], strides = [1, 1]} : vector<9x128xf32> to vector<1x128xf32>
    %c0_23 = arith.constant 0 : index
    %c2 = arith.constant 2 : index
    %c0_24 = arith.constant 0 : index
    %30 = vector.load %arg11[%c0_23, %c2, %c0_24] : memref<18x18x128xf32, #tpu.memory_space<vmem>>, vector<16x16x128xf32>
    %31 = vector.shape_cast %29 : vector<1x128xf32> to vector<1x1x128xf32>
    %32 = vector.broadcast %31 : vector<1x1x128xf32> to vector<16x16x128xf32>
    %33 = arith.mulf %30, %32 : vector<16x16x128xf32>
    %34 = arith.addf %28, %33 : vector<16x16x128xf32>
    %35 = vector.extract_strided_slice %15 {offsets = [3, 0], sizes = [1, 128], strides = [1, 1]} : vector<9x128xf32> to vector<1x128xf32>
    %c1_25 = arith.constant 1 : index
    %c0_26 = arith.constant 0 : index
    %c0_27 = arith.constant 0 : index
    %36 = vector.load %arg11[%c1_25, %c0_26, %c0_27] : memref<18x18x128xf32, #tpu.memory_space<vmem>>, vector<16x16x128xf32>
    %37 = vector.shape_cast %35 : vector<1x128xf32> to vector<1x1x128xf32>
    %38 = vector.broadcast %37 : vector<1x1x128xf32> to vector<16x16x128xf32>
    %39 = arith.mulf %36, %38 : vector<16x16x128xf32>
    %40 = arith.addf %34, %39 : vector<16x16x128xf32>
    %41 = vector.extract_strided_slice %15 {offsets = [4, 0], sizes = [1, 128], strides = [1, 1]} : vector<9x128xf32> to vector<1x128xf32>
    %c1_28 = arith.constant 1 : index
    %c1_29 = arith.constant 1 : index
    %c0_30 = arith.constant 0 : index
    %42 = vector.load %arg11[%c1_28, %c1_29, %c0_30] : memref<18x18x128xf32, #tpu.memory_space<vmem>>, vector<16x16x128xf32>
    %43 = vector.shape_cast %41 : vector<1x128xf32> to vector<1x1x128xf32>
    %44 = vector.broadcast %43 : vector<1x1x128xf32> to vector<16x16x128xf32>
    %45 = arith.mulf %42, %44 : vector<16x16x128xf32>
    %46 = arith.addf %40, %45 : vector<16x16x128xf32>
    %47 = vector.extract_strided_slice %15 {offsets = [5, 0], sizes = [1, 128], strides = [1, 1]} : vector<9x128xf32> to vector<1x128xf32>
    %c1_31 = arith.constant 1 : index
    %c2_32 = arith.constant 2 : index
    %c0_33 = arith.constant 0 : index
    %48 = vector.load %arg11[%c1_31, %c2_32, %c0_33] : memref<18x18x128xf32, #tpu.memory_space<vmem>>, vector<16x16x128xf32>
    %49 = vector.shape_cast %47 : vector<1x128xf32> to vector<1x1x128xf32>
    %50 = vector.broadcast %49 : vector<1x1x128xf32> to vector<16x16x128xf32>
    %51 = arith.mulf %48, %50 : vector<16x16x128xf32>
    %52 = arith.addf %46, %51 : vector<16x16x128xf32>
    %53 = vector.extract_strided_slice %15 {offsets = [6, 0], sizes = [1, 128], strides = [1, 1]} : vector<9x128xf32> to vector<1x128xf32>
    %c2_34 = arith.constant 2 : index
    %c0_35 = arith.constant 0 : index
    %c0_36 = arith.constant 0 : index
    %54 = vector.load %arg11[%c2_34, %c0_35, %c0_36] : memref<18x18x128xf32, #tpu.memory_space<vmem>>, vector<16x16x128xf32>
    %55 = vector.shape_cast %53 : vector<1x128xf32> to vector<1x1x128xf32>
    %56 = vector.broadcast %55 : vector<1x1x128xf32> to vector<16x16x128xf32>
    %57 = arith.mulf %54, %56 : vector<16x16x128xf32>
    %58 = arith.addf %52, %57 : vector<16x16x128xf32>
    %59 = vector.extract_strided_slice %15 {offsets = [7, 0], sizes = [1, 128], strides = [1, 1]} : vector<9x128xf32> to vector<1x128xf32>
    %c2_37 = arith.constant 2 : index
    %c1_38 = arith.constant 1 : index
    %c0_39 = arith.constant 0 : index
    %60 = vector.load %arg11[%c2_37, %c1_38, %c0_39] : memref<18x18x128xf32, #tpu.memory_space<vmem>>, vector<16x16x128xf32>
    %61 = vector.shape_cast %59 : vector<1x128xf32> to vector<1x1x128xf32>
    %62 = vector.broadcast %61 : vector<1x1x128xf32> to vector<16x16x128xf32>
    %63 = arith.mulf %60, %62 : vector<16x16x128xf32>
    %64 = arith.addf %58, %63 : vector<16x16x128xf32>
    %65 = vector.extract_strided_slice %15 {offsets = [8, 0], sizes = [1, 128], strides = [1, 1]} : vector<9x128xf32> to vector<1x128xf32>
    %c2_40 = arith.constant 2 : index
    %c2_41 = arith.constant 2 : index
    %c0_42 = arith.constant 0 : index
    %66 = vector.load %arg11[%c2_40, %c2_41, %c0_42] : memref<18x18x128xf32, #tpu.memory_space<vmem>>, vector<16x16x128xf32>
    %67 = vector.shape_cast %65 : vector<1x128xf32> to vector<1x1x128xf32>
    %68 = vector.broadcast %67 : vector<1x1x128xf32> to vector<16x16x128xf32>
    %69 = arith.mulf %66, %68 : vector<16x16x128xf32>
    %70 = arith.addf %64, %69 : vector<16x16x128xf32>
    %71 = vector.shape_cast %70 : vector<16x16x128xf32> to vector<256x128xf32>
    %c0_43 = arith.constant 0 : index
    %c0_44 = arith.constant 0 : index
    %72 = vector.load %arg5[%c0_43, %c0_44] : memref<1x128xf32, #tpu.memory_space<vmem>>, vector<1x128xf32>
    %73 = vector.broadcast %72 : vector<1x128xf32> to vector<256x128xf32>
    %74 = arith.addf %71, %73 : vector<256x128xf32>
    %cst_45 = arith.constant 0.000000e+00 : f32
    %75 = vector.broadcast %cst_45 : f32 to vector<256x128xf32>
    %76 = arith.maximumf %74, %75 : vector<256x128xf32>
    %77 = arith.truncf %76 : vector<256x128xf32> to vector<256x128xbf16>
    %c0_46 = arith.constant 0 : index
    %c0_47 = arith.constant 0 : index
    %78 = vector.load %arg6[%c0_46, %c0_47] : memref<128x128xbf16, #tpu.memory_space<vmem>>, vector<128x128xbf16>
    %cst_48 = arith.constant dense<0.000000e+00> : vector<256x128xf32>
    %79 = tpu.matmul %77, %78, %cst_48 {dimension_numbers = #tpu.dot_dimension_numbers<[1], [0], [0], [1], [0, 0, 1, 1], [], []>} : vector<256x128xbf16>, vector<128x128xbf16>, vector<256x128xf32> -> vector<256x128xf32>
    %c0_49 = arith.constant 0 : index
    %c0_50 = arith.constant 0 : index
    %80 = vector.load %arg7[%c0_49, %c0_50] : memref<1x128xf32, #tpu.memory_space<vmem>>, vector<1x128xf32>
    %81 = vector.broadcast %80 : vector<1x128xf32> to vector<256x128xf32>
    %82 = arith.addf %79, %81 : vector<256x128xf32>
    %cst_51 = arith.constant 0.000000e+00 : f32
    %83 = vector.broadcast %cst_51 : f32 to vector<256x128xf32>
    %84 = arith.maximumf %82, %83 : vector<256x128xf32>
    %85 = arith.truncf %84 : vector<256x128xf32> to vector<256x128xbf16>
    %c0_52 = arith.constant 0 : index
    %c0_53 = arith.constant 0 : index
    %86 = vector.load %arg8[%c0_52, %c0_53] : memref<128x128xbf16, #tpu.memory_space<vmem>>, vector<128x128xbf16>
    %cst_54 = arith.constant dense<0.000000e+00> : vector<256x128xf32>
    %87 = tpu.matmul %85, %86, %cst_54 {dimension_numbers = #tpu.dot_dimension_numbers<[1], [0], [0], [1], [0, 0, 1, 1], [], []>} : vector<256x128xbf16>, vector<128x128xbf16>, vector<256x128xf32> -> vector<256x128xf32>
    %c0_55 = arith.constant 0 : index
    %c0_56 = arith.constant 0 : index
    %88 = vector.load %arg9[%c0_55, %c0_56] : memref<1x128xf32, #tpu.memory_space<vmem>>, vector<1x128xf32>
    %89 = vector.broadcast %88 : vector<1x128xf32> to vector<256x128xf32>
    %90 = arith.addf %87, %89 : vector<256x128xf32>
    %91 = arith.addf %90, %2 : vector<256x128xf32>
    %92 = vector.shape_cast %91 : vector<256x128xf32> to vector<16x16x128xf32>
    %c0_57 = arith.constant 0 : index
    %c0_58 = arith.constant 0 : index
    %c0_59 = arith.constant 0 : index
    %c0_60 = arith.constant 0 : index
    %93 = vector.load %arg10[%c0_57, %c0_58, %c0_59, %c0_60] : memref<1x16x16x128xf32, #tpu.memory_space<vmem>>, vector<1x16x16x128xf32>
    %94 = vector.shape_cast %93 : vector<1x16x16x128xf32> to vector<16x16x128xf32>
    %95 = vector.shape_cast %92 : vector<16x16x128xf32> to vector<1x16x16x128xf32>
    tpu.vector_store %arg10[%c0_57, %c0_58, %c0_59, %c0_60], %95 {strides = array<i32>} : memref<1x16x16x128xf32, #tpu.memory_space<vmem>>, vector<1x16x16x128xf32>,
    return
  }
  func.func @transform_0(%arg0: i32) -> (i32, i32, i32, i32) {
    %c0_i32 = arith.constant 0 : i32
    %c0_i32_0 = arith.constant 0 : i32
    %c0_i32_1 = arith.constant 0 : i32
    %c0_i32_2 = arith.constant 0 : i32
    return %arg0, %c0_i32, %c0_i32_0, %c0_i32_1 : i32, i32, i32, i32
  }
  func.func @transform_1(%arg0: i32) -> (i32, i32) {
    %c0_i32 = arith.constant 0 : i32
    %c0_i32_0 = arith.constant 0 : i32
    %c0_i32_1 = arith.constant 0 : i32
    return %c0_i32, %c0_i32_0 : i32, i32
  }
  func.func @transform_2(%arg0: i32) -> (i32, i32) {
    %c0_i32 = arith.constant 0 : i32
    %c0_i32_0 = arith.constant 0 : i32
    %c0_i32_1 = arith.constant 0 : i32
    return %c0_i32, %c0_i32_0 : i32, i32
  }
  func.func @transform_3(%arg0: i32) -> (i32, i32) {
    %c0_i32 = arith.constant 0 : i32
    %c0_i32_0 = arith.constant 0 : i32
    %c0_i32_1 = arith.constant 0 : i32
    return %c0_i32, %c0_i32_0 : i32, i32
  }
  func.func @transform_4(%arg0: i32) -> (i32, i32) {
    %c0_i32 = arith.constant 0 : i32
    %c0_i32_0 = arith.constant 0 : i32
    %c0_i32_1 = arith.constant 0 : i32
    return %c0_i32, %c0_i32_0 : i32, i32
  }
  func.func @transform_5(%arg0: i32) -> (i32, i32) {
    %c0_i32 = arith.constant 0 : i32
    %c0_i32_0 = arith.constant 0 : i32
    %c0_i32_1 = arith.constant 0 : i32
    return %c0_i32, %c0_i32_0 : i32, i32
  }
  func.func @transform_6(%arg0: i32) -> (i32, i32) {
    %c0_i32 = arith.constant 0 : i32
    %c0_i32_0 = arith.constant 0 : i32
    %c0_i32_1 = arith.constant 0 : i32
    return %c0_i32, %c0_i32_0 : i32, i32
  }
  func.func @transform_7(%arg0: i32) -> (i32, i32) {
    %c0_i32 = arith.constant 0 : i32
    %c0_i32_0 = arith.constant 0 : i32
    %c0_i32_1 = arith.constant 0 : i32
    return %c0_i32, %c0_i32_0 : i32, i32
  }
  func.func @transform_8(%arg0: i32) -> (i32, i32) {
    %c0_i32 = arith.constant 0 : i32
    %c0_i32_0 = arith.constant 0 : i32
    %c0_i32_1 = arith.constant 0 : i32
    return %c0_i32, %c0_i32_0 : i32, i32
  }
  func.func @transform_9(%arg0: i32) -> (i32, i32, i32, i32) {
    %c0_i32 = arith.constant 0 : i32
    %c0_i32_0 = arith.constant 0 : i32
    %c0_i32_1 = arith.constant 0 : i32
    %c0_i32_2 = arith.constant 0 : i32
    return %arg0, %c0_i32, %c0_i32_0, %c0_i32_1 : i32, i32, i32, i32
  }
}

</mosaic_0001>

<llo_original>
// kernel: tpu_custom_call.1
$region0: #{tpu_custom_call.1}
  #allocation0 [shape = 'u32[]', space=smem, size = 0x4, offset = 0x4, fixed_abs, tag = 'smem constant byte address 0x4 - core index']
  #allocation1 [shape = 'u32[144,128]{1,0:T(1,128)}', space=vmem, size = 0x12000, scoped, tag = 'internal scratch']
  #allocation2 [shape = 'f32[18,18,128]{2,1,0:T(8,128)}', space=vmem, size = 0x36000, scoped, tag = 'scratch operand']
  %s0 = inlined_call_operand.hbm [shape: f32[2,16,16,128], index: 0, kind: input, shape index: {}]
  %s1 = inlined_call_operand.hbm [shape: bf16[128,128], index: 1, kind: input, shape index: {}]
  %s2 = inlined_call_operand.vmem [shape: f32[1,128], index: 2, kind: input, shape index: {}]
  %s3 = inlined_call_operand.hbm [shape: f32[9,128], index: 3, kind: input, shape index: {}]
  %s4 = inlined_call_operand.vmem [shape: f32[1,128], index: 4, kind: input, shape index: {}]
  %s5 = inlined_call_operand.hbm [shape: bf16[128,128], index: 5, kind: input, shape index: {}]
  %s6 = inlined_call_operand.vmem [shape: f32[1,128], index: 6, kind: input, shape index: {}]
  %s7 = inlined_call_operand.hbm [shape: bf16[128,128], index: 7, kind: input, shape index: {}]
  %s8 = inlined_call_operand.vmem [shape: f32[1,128], index: 8, kind: input, shape index: {}]
  %s9 = inlined_call_operand.hbm [shape: f32[2,16,16,128], index: 9, kind: output, shape index: {}]
  %s10 = sld [smem:[#allocation0]]
  $region89: #{tpu_custom_call.1} parent=0
    _
  %s12 = ssub.s32 1, %s10
  %s13 = scalar_select 0, %s12, %s10
  $region1: #{tpu_custom_call.1} parent=0
    #allocation3 [shape = 'u8[262144]{0}', space=vmem, size = 0x40000, scoped, tag = 'input window, operand 0']
    #allocation4 [shape = 's32[2]{0}', space=sflag, size = 0x8, scoped, tag = 'scoped memory for tpu_custom_call.1']
    #allocation5 [shape = 's32[2]{0}', space=sflag, size = 0x8, scoped, tag = 'scoped memory for tpu_custom_call.1']
    #allocation6 [shape = 'u8[32768]{0}', space=vmem, size = 0x8000, scoped, tag = 'input window, operand 1, single buffered']
    #allocation7 [shape = 's32[1]{0}', space=sflag, size = 0x4, scoped, tag = 'scoped memory for tpu_custom_call.1']
    #allocation8 [shape = 'u8[8192]{0}', space=vmem, size = 0x2000, scoped, tag = 'input window, operand 3, single buffered']
    #allocation9 [shape = 'u8[32768]{0}', space=vmem, size = 0x8000, scoped, tag = 'input window, operand 5, single buffered']
    #allocation10 [shape = 's32[1]{0}', space=sflag, size = 0x4, scoped, tag = 'scoped memory for tpu_custom_call.1']
    #allocation11 [shape = 'u8[32768]{0}', space=vmem, size = 0x8000, scoped, tag = 'input window, operand 7, single buffered']
    #allocation12 [shape = 'u8[262144]{0}', space=vmem, size = 0x40000, scoped, tag = 'output window, operand 0']
    %14 = vsyncpa [#allocation4], 0
    %s15 = scalar_lea.sflag [#allocation4], 1
    %16 = vsyncpa %s15, 0
    %17 = vsyncpa [#allocation7], 0
    %18 = vsyncpa [#allocation10], 0
    %19 = vsyncpa [#allocation5], 0
    %s20 = scalar_lea.sflag [#allocation5], 1
    %21 = vsyncpa %s20, 0
    loop: start=0, step=1, limit=4
    $region2: #{tpu_custom_call.1} parent=1 // loop_pre_header
      _
    $region3: #{tpu_custom_call.1} parent=1 // loop_header
      %s23 = sphi 0, %s27
      %p24 = scmp.ge.s32.totalorder %s23, 4
      %s33 = sphi 0, %s35
      %s36 = sphi 0, %s33
      %s37 = sphi 0, %s36
      %s53 = sphi 0, %s37
      %s57 = sphi 0, %s57
      %s59 = sphi 0, %s57
      %s60 = sphi 0, %s59
      %s74 = sphi 0, %s60
      %s78 = sphi 0, %s78
      %s80 = sphi 0, %s78
      %s81 = sphi 0, %s80
      %s95 = sphi 0, %s81
      %s99 = sphi 0, %s99
      %s101 = sphi 0, %s99
      %s102 = sphi 0, %s101
      %s116 = sphi 0, %s102
      %s120 = sphi 0, %s120
      %s122 = sphi 0, %s120
      %s123 = sphi 0, %s122
      %s137 = sphi 0, %s123
      %s141 = sphi 0, %s141
      %s143 = sphi 0, %s141
      %s144 = sphi 0, %s143
      %s158 = sphi 0, %s144
      %s162 = sphi 0, %s162
      %s164 = sphi 0, %s162
      %s165 = sphi 0, %s164
      %s179 = sphi 0, %s165
      %s183 = sphi 0, %s183
      %s185 = sphi 0, %s183
      %s186 = sphi 0, %s185
      %s200 = sphi 0, %s186
      %s204 = sphi 0, %s204
      %s206 = sphi 0, %s204
      %s207 = sphi 0, %s206
      %s221 = sphi 0, %s207
      %s227 = sphi 0, %s229
      %s230 = sphi 0, %s227
      %s231 = sphi 0, %s230
      %s247 = sphi 0, %s231
    $region4: #{tpu_custom_call.1} parent=1 // loop_header_branch
      %26 = sbr.rel (%p24) target = $region8
    $region5: #{tpu_custom_call.1} parent=1 // loop_body
      %s28 = ssub.s32 %s23, 1
      %s29 = ssub.s32 %s23, 2
      %s30 = sadd.s32 %s23, 1
      %s31 = ssub.s32 %s23, %s30
      %p32 = scmp.eq.s32.totalorder %s31, 0
      %s34 = sadd.s32 %s33, 1
      %s35 = scalar_select %p32, %s33, %s34
      %p38 = pneg %p32
      %p39 = scmp.eq.s32.totalorder %s23, 1
      %p40 = por %p38, %p39
      %p41 = scmp.ne.s32.totalorder %s33, %s36
      %p42 = scmp.eq.s32.totalorder %s23, 0
      %p43 = por %p41, %p42
      %p44 = scmp.ne.s32.totalorder %s33, %s36
      %p45 = scmp.eq.s32.totalorder %s28, 1
      %p46 = por %p44, %p45
      %p47 = scmp.ne.s32.totalorder %s36, %s37
      %p48 = scmp.eq.s32.totalorder %s28, 0
      %p49 = por %p47, %p48
      %p50 = scmp.ne.s32.totalorder %s36, %s37
      %p51 = scmp.eq.s32.totalorder %s29, 1
      %p52 = por %p50, %p51
      %p54 = scmp.ne.s32.totalorder %s37, %s53
      %p55 = scmp.eq.s32.totalorder %s29, 0
      %p56 = por %p54, %p55
      %s58 = sadd.s32 %s57, 1
      %p61 = scmp.eq.s32.totalorder %s23, 1
      %p62 = scmp.ne.s32.totalorder %s57, %s59
      %p63 = scmp.eq.s32.totalorder %s23, 0
      %p64 = por %p62, %p63
      %p65 = scmp.ne.s32.totalorder %s57, %s59
      %p66 = scmp.eq.s32.totalorder %s28, 1
      %p67 = por %p65, %p66
      %p68 = scmp.ne.s32.totalorder %s59, %s60
      %p69 = scmp.eq.s32.totalorder %s28, 0
      %p70 = por %p68, %p69
      %p71 = scmp.ne.s32.totalorder %s59, %s60
      %p72 = scmp.eq.s32.totalorder %s29, 1
      %p73 = por %p71, %p72
      %p75 = scmp.ne.s32.totalorder %s60, %s74
      %p76 = scmp.eq.s32.totalorder %s29, 0
      %p77 = por %p75, %p76
      %s79 = sadd.s32 %s78, 1
      %p82 = scmp.eq.s32.totalorder %s23, 1
      %p83 = scmp.ne.s32.totalorder %s78, %s80
      %p84 = scmp.eq.s32.totalorder %s23, 0
      %p85 = por %p83, %p84
      %p86 = scmp.ne.s32.totalorder %s78, %s80
      %p87 = scmp.eq.s32.totalorder %s28, 1
      %p88 = por %p86, %p87
      %p89 = scmp.ne.s32.totalorder %s80, %s81
      %p90 = scmp.eq.s32.totalorder %s28, 0
      %p91 = por %p89, %p90
      %p92 = scmp.ne.s32.totalorder %s80, %s81
      %p93 = scmp.eq.s32.totalorder %s29, 1
      %p94 = por %p92, %p93
      %p96 = scmp.ne.s32.totalorder %s81, %s95
      %p97 = scmp.eq.s32.totalorder %s29, 0
      %p98 = por %p96, %p97
      %s100 = sadd.s32 %s99, 1
      %p103 = scmp.eq.s32.totalorder %s23, 1
      %p104 = scmp.ne.s32.totalorder %s99, %s101
      %p105 = scmp.eq.s32.totalorder %s23, 0
      %p106 = por %p104, %p105
      %p107 = scmp.ne.s32.totalorder %s99, %s101
      %p108 = scmp.eq.s32.totalorder %s28, 1
      %p109 = por %p107, %p108
      %p110 = scmp.ne.s32.totalorder %s101, %s102
      %p111 = scmp.eq.s32.totalorder %s28, 0
      %p112 = por %p110, %p111
      %p113 = scmp.ne.s32.totalorder %s101, %s102
      %p114 = scmp.eq.s32.totalorder %s29, 1
      %p115 = por %p113, %p114
      %p117 = scmp.ne.s32.totalorder %s102, %s116
      %p118 = scmp.eq.s32.totalorder %s29, 0
      %p119 = por %p117, %p118
      %s121 = sadd.s32 %s120, 1
      %p124 = scmp.eq.s32.totalorder %s23, 1
      %p125 = scmp.ne.s32.totalorder %s120, %s122
      %p126 = scmp.eq.s32.totalorder %s23, 0
      %p127 = por %p125, %p126
      %p128 = scmp.ne.s32.totalorder %s120, %s122
      %p129 = scmp.eq.s32.totalorder %s28, 1
      %p130 = por %p128, %p129
      %p131 = scmp.ne.s32.totalorder %s122, %s123
      %p132 = scmp.eq.s32.totalorder %s28, 0
      %p133 = por %p131, %p132
      %p134 = scmp.ne.s32.totalorder %s122, %s123
      %p135 = scmp.eq.s32.totalorder %s29, 1
      %p136 = por %p134, %p135
      %p138 = scmp.ne.s32.totalorder %s123, %s137
      %p139 = scmp.eq.s32.totalorder %s29, 0
      %p140 = por %p138, %p139
      %s142 = sadd.s32 %s141, 1
      %p145 = scmp.eq.s32.totalorder %s23, 1
      %p146 = scmp.ne.s32.totalorder %s141, %s143
      %p147 = scmp.eq.s32.totalorder %s23, 0
      %p148 = por %p146, %p147
      %p149 = scmp.ne.s32.totalorder %s141, %s143
      %p150 = scmp.eq.s32.totalorder %s28, 1
      %p151 = por %p149, %p150
      %p152 = scmp.ne.s32.totalorder %s143, %s144
      %p153 = scmp.eq.s32.totalorder %s28, 0
      %p154 = por %p152, %p153
      %p155 = scmp.ne.s32.totalorder %s143, %s144
      %p156 = scmp.eq.s32.totalorder %s29, 1
      %p157 = por %p155, %p156
      %p159 = scmp.ne.s32.totalorder %s144, %s158
      %p160 = scmp.eq.s32.totalorder %s29, 0
      %p161 = por %p159, %p160
      %s163 = sadd.s32 %s162, 1
      %p166 = scmp.eq.s32.totalorder %s23, 1
      %p167 = scmp.ne.s32.totalorder %s162, %s164
      %p168 = scmp.eq.s32.totalorder %s23, 0
      %p169 = por %p167, %p168
      %p170 = scmp.ne.s32.totalorder %s162, %s164
      %p171 = scmp.eq.s32.totalorder %s28, 1
      %p172 = por %p170, %p171
      %p173 = scmp.ne.s32.totalorder %s164, %s165
      %p174 = scmp.eq.s32.totalorder %s28, 0
      %p175 = por %p173, %p174
      %p176 = scmp.ne.s32.totalorder %s164, %s165
      %p177 = scmp.eq.s32.totalorder %s29, 1
      %p178 = por %p176, %p177
      %p180 = scmp.ne.s32.totalorder %s165, %s179
      %p181 = scmp.eq.s32.totalorder %s29, 0
      %p182 = por %p180, %p181
      %s184 = sadd.s32 %s183, 1
      %p187 = scmp.eq.s32.totalorder %s23, 1
      %p188 = scmp.ne.s32.totalorder %s183, %s185
      %p189 = scmp.eq.s32.totalorder %s23, 0
      %p190 = por %p188, %p189
      %p191 = scmp.ne.s32.totalorder %s183, %s185
      %p192 = scmp.eq.s32.totalorder %s28, 1
      %p193 = por %p191, %p192
      %p194 = scmp.ne.s32.totalorder %s185, %s186
      %p195 = scmp.eq.s32.totalorder %s28, 0
      %p196 = por %p194, %p195
      %p197 = scmp.ne.s32.totalorder %s185, %s186
      %p198 = scmp.eq.s32.totalorder %s29, 1
      %p199 = por %p197, %p198
      %p201 = scmp.ne.s32.totalorder %s186, %s200
      %p202 = scmp.eq.s32.totalorder %s29, 0
      %p203 = por %p201, %p202
      %s205 = sadd.s32 %s204, 1
      %p208 = scmp.eq.s32.totalorder %s23, 1
      %p209 = scmp.ne.s32.totalorder %s204, %s206
      %p210 = scmp.eq.s32.totalorder %s23, 0
      %p211 = por %p209, %p210
      %p212 = scmp.ne.s32.totalorder %s204, %s206
      %p213 = scmp.eq.s32.totalorder %s28, 1
      %p214 = por %p212, %p213
      %p215 = scmp.ne.s32.totalorder %s206, %s207
      %p216 = scmp.eq.s32.totalorder %s28, 0
      %p217 = por %p215, %p216
      %p218 = scmp.ne.s32.totalorder %s206, %s207
      %p219 = scmp.eq.s32.totalorder %s29, 1
      %p220 = por %p218, %p219
      %p222 = scmp.ne.s32.totalorder %s207, %s221
      %p223 = scmp.eq.s32.totalorder %s29, 0
      %p224 = por %p222, %p223
      %s225 = ssub.s32 %s23, %s30
      %p226 = scmp.eq.s32.totalorder %s225, 0
      %s228 = sadd.s32 %s227, 1
      %s229 = scalar_select %p226, %s227, %s228
      %p232 = pneg %p226
      %p233 = scmp.eq.s32.totalorder %s23, 1
      %p234 = por %p232, %p233
      %p235 = scmp.ne.s32.totalorder %s227, %s230
      %p236 = scmp.eq.s32.totalorder %s23, 0
      %p237 = por %p235, %p236
      %p238 = scmp.ne.s32.totalorder %s227, %s230
      %p239 = scmp.eq.s32.totalorder %s28, 1
      %p240 = por %p238, %p239
      %p241 = scmp.ne.s32.totalorder %s230, %s231
      %p242 = scmp.eq.s32.totalorder %s28, 0
      %p243 = por %p241, %p242
      %p244 = scmp.ne.s32.totalorder %s230, %s231
      %p245 = scmp.eq.s32.totalorder %s29, 1
      %p246 = por %p244, %p245
      %p248 = scmp.ne.s32.totalorder %s231, %s247
      %p249 = scmp.eq.s32.totalorder %s29, 0
      %p250 = por %p248, %p249
      %p251 = scmp.le.s32.totalorder 1, %s23
      %p252 = scmp.lt.s32.totalorder %s23, 3
      %p253 = pnand %p251, %p252
      %p254 = pneg %p253
      // Predicated region
      $region9: #{tpu_custom_call.1} parent=5 // pred_check
        _
      $region10: #{tpu_custom_call.1} parent=5 // pred_check_branch
        %256 = sbr.rel (%p253) target = $region12
      $region11: #{tpu_custom_call.1} parent=5 // pred_region
        %s257 = ssub.s32 %s23, 1
        // Predicated region
        $region13: #{tpu_custom_call.1} parent=11 // pred_check
          %p258 = pneg %p70
        $region14: #{tpu_custom_call.1} parent=11 // pred_check_branch
          %260 = sbr.rel (%p258) target = $region16
        $region15: #{tpu_custom_call.1} parent=11 // pred_region
          %s262 = ssub.s32 1024, 1024
          %263 = vsyncadd [#allocation7], %s262
          %s264 = sshll.u32 [#allocation6], 4
          %s265 = int_to_ptr.vmem [resolvable:$true] %s264
          %270 = dma.hbm_to_vmem [thread:$0]  %s1, 1024, %s265, [#allocation7], 64, 64, 4
        $region16: #{tpu_custom_call.1} parent=11 // pred_fallthru
          _
        // Predicated region
        $region17: #{tpu_custom_call.1} parent=11 // pred_check
          %p271 = pneg %p91
        $region18: #{tpu_custom_call.1} parent=11 // pred_check_branch
          %273 = sbr.rel (%p271) target = $region20
        $region19: #{tpu_custom_call.1} parent=11 // pred_region
          _
        $region20: #{tpu_custom_call.1} parent=11 // pred_fallthru
          _
        // Predicated region
        $region21: #{tpu_custom_call.1} parent=11 // pred_check
          %p274 = pneg %p112
        $region22: #{tpu_custom_call.1} parent=11 // pred_check_branch
          %276 = sbr.rel (%p274) target = $region24
        $region23: #{tpu_custom_call.1} parent=11 // pred_region
          %s278 = ssub.s32 256, 256
          %279 = vsyncadd [#allocation7], %s278
          %s280 = sshll.u32 [#allocation8], 4
          %s281 = int_to_ptr.vmem [resolvable:$true] %s280
          %286 = dma.hbm_to_vmem [thread:$0]  %s3, 256, %s281, [#allocation7], 128, 128, 8
        $region24: #{tpu_custom_call.1} parent=11 // pred_fallthru
          _
        // Predicated region
        $region25: #{tpu_custom_call.1} parent=11 // pred_check
          %p287 = pneg %p133
        $region26: #{tpu_custom_call.1} parent=11 // pred_check_branch
          %289 = sbr.rel (%p287) target = $region28
        $region27: #{tpu_custom_call.1} parent=11 // pred_region
          _
        $region28: #{tpu_custom_call.1} parent=11 // pred_fallthru
          _
        // Predicated region
        $region29: #{tpu_custom_call.1} parent=11 // pred_check
          %p290 = pneg %p154
        $region30: #{tpu_custom_call.1} parent=11 // pred_check_branch
          %292 = sbr.rel (%p290) target = $region32
        $region31: #{tpu_custom_call.1} parent=11 // pred_region
          %s294 = ssub.s32 1024, 1024
          %295 = vsyncadd [#allocation10], %s294
          %s296 = sshll.u32 [#allocation9], 4
          %s297 = int_to_ptr.vmem [resolvable:$true] %s296
          %302 = dma.hbm_to_vmem [thread:$0]  %s5, 1024, %s297, [#allocation10], 64, 64, 4
        $region32: #{tpu_custom_call.1} parent=11 // pred_fallthru
          _
        // Predicated region
        $region33: #{tpu_custom_call.1} parent=11 // pred_check
          %p303 = pneg %p175
        $region34: #{tpu_custom_call.1} parent=11 // pred_check_branch
          %305 = sbr.rel (%p303) target = $region36
        $region35: #{tpu_custom_call.1} parent=11 // pred_region
          _
        $region36: #{tpu_custom_call.1} parent=11 // pred_fallthru
          _
        // Predicated region
        $region37: #{tpu_custom_call.1} parent=11 // pred_check
          %p306 = pneg %p196
        $region38: #{tpu_custom_call.1} parent=11 // pred_check_branch
          %308 = sbr.rel (%p306) target = $region40
        $region39: #{tpu_custom_call.1} parent=11 // pred_region
          %s310 = ssub.s32 1024, 1024
          %311 = vsyncadd [#allocation10], %s310
          %s312 = sshll.u32 [#allocation11], 4
          %s313 = int_to_ptr.vmem [resolvable:$true] %s312
          %318 = dma.hbm_to_vmem [thread:$0]  %s7, 1024, %s313, [#allocation10], 64, 64, 4
        $region40: #{tpu_custom_call.1} parent=11 // pred_fallthru
          _
        // Predicated region
        $region41: #{tpu_custom_call.1} parent=11 // pred_check
          %p319 = pneg %p217
        $region42: #{tpu_custom_call.1} parent=11 // pred_check_branch
          %321 = sbr.rel (%p319) target = $region44
        $region43: #{tpu_custom_call.1} parent=11 // pred_region
          _
        $region44: #{tpu_custom_call.1} parent=11 // pred_fallthru
          _
      $region12: #{tpu_custom_call.1} parent=5 // pred_fallthru
        _
      %p322 = scmp.lt.s32.totalorder %s23, 2
      // Predicated region
      $region45: #{tpu_custom_call.1} parent=5 // pred_check
        %p323 = pneg %p322
      $region46: #{tpu_custom_call.1} parent=5 // pred_check_branch
        %325 = sbr.rel (%p323) target = $region48
      $region47: #{tpu_custom_call.1} parent=5 // pred_region
        // Predicated region
        $region49: #{tpu_custom_call.1} parent=47 // pred_check
          %p326 = pneg %p43
        $region50: #{tpu_custom_call.1} parent=47 // pred_check_branch
          %328 = sbr.rel (%p326) target = $region52
        $region51: #{tpu_custom_call.1} parent=47 // pred_region
          %s329 = sand.u32 %s33, 1
          %s330 = scalar_lea.sflag [#allocation4], %s329
          %s331 = sand.u32 %s33, 1
          %s332 = smul.addr %s331, 256
          %s333 = scalar_lea.vmem [#allocation3], %s332
          %s335 = ssub.s32 4096, 4096
          %336 = vsyncadd %s330, %s335
          %s337 = smul.addr %s23, 32
          %s338 = smul.addr %s337, 128
          %s339 = scalar_lea.hbm %s0, %s338
          %s340 = sshll.u32 %s333, 4
          %s341 = int_to_ptr.vmem [resolvable:$true] %s340
          %346 = dma.hbm_to_vmem [thread:$0]  %s339, 4096, %s341, %s330, 128, 128, 8
        $region52: #{tpu_custom_call.1} parent=47 // pred_fallthru
          _
      $region48: #{tpu_custom_call.1} parent=5 // pred_fallthru
        _
      %p347 = scmp.le.s32.totalorder 1, %s23
      %p348 = scmp.lt.s32.totalorder %s23, 3
      %p349 = pnand %p347, %p348
      %p350 = pneg %p349
      // Predicated region
      $region53: #{tpu_custom_call.1} parent=5 // pred_check
        _
      $region54: #{tpu_custom_call.1} parent=5 // pred_check_branch
        %352 = sbr.rel (%p349) target = $region56
      $region55: #{tpu_custom_call.1} parent=5 // pred_region
        %s353 = ssub.s32 %s23, 1
        %s354 = sand.u32 %s36, 1
        %s355 = scalar_lea.sflag [#allocation4], %s354
        %s356 = sand.u32 %s36, 1
        %s357 = smul.addr %s356, 256
        %s358 = scalar_lea.vmem [#allocation3], %s357
        // Predicated region
        $region57: #{tpu_custom_call.1} parent=55 // pred_check
          %p359 = pneg %p49
        $region58: #{tpu_custom_call.1} parent=55 // pred_check_branch
          %361 = sbr.rel (%p359) target = $region60
        $region59: #{tpu_custom_call.1} parent=55 // pred_region
          %362 = dma.done %s355, 4096
        $region60: #{tpu_custom_call.1} parent=55 // pred_fallthru
          _
        // Predicated region
        $region61: #{tpu_custom_call.1} parent=55 // pred_check
          %p363 = pneg %p70
        $region62: #{tpu_custom_call.1} parent=55 // pred_check_branch
          %365 = sbr.rel (%p363) target = $region64
        $region63: #{tpu_custom_call.1} parent=55 // pred_region
          %366 = dma.done [#allocation7], 1024
        $region64: #{tpu_custom_call.1} parent=55 // pred_fallthru
          _
        // Predicated region
        $region65: #{tpu_custom_call.1} parent=55 // pred_check
          %p367 = pneg %p112
        $region66: #{tpu_custom_call.1} parent=55 // pred_check_branch
          %369 = sbr.rel (%p367) target = $region68
        $region67: #{tpu_custom_call.1} parent=55 // pred_region
          %370 = dma.done [#allocation7], 256
        $region68: #{tpu_custom_call.1} parent=55 // pred_fallthru
          _
        // Predicated region
        $region69: #{tpu_custom_call.1} parent=55 // pred_check
          %p371 = pneg %p154
        $region70: #{tpu_custom_call.1} parent=55 // pred_check_branch
          %373 = sbr.rel (%p371) target = $region72
        $region71: #{tpu_custom_call.1} parent=55 // pred_region
          %374 = dma.done [#allocation10], 1024
        $region72: #{tpu_custom_call.1} parent=55 // pred_fallthru
          _
        // Predicated region
        $region73: #{tpu_custom_call.1} parent=55 // pred_check
          %p375 = pneg %p196
        $region74: #{tpu_custom_call.1} parent=55 // pred_check_branch
          %377 = sbr.rel (%p375) target = $region76
        $region75: #{tpu_custom_call.1} parent=55 // pred_region
          %378 = dma.done [#allocation10], 1024
        $region76: #{tpu_custom_call.1} parent=55 // pred_fallthru
          _
        %s379 = sand.u32 %s36, 1
        %s380 = scalar_lea.sflag [#allocation4], %s379
        %s381 = sand.u32 %s36, 1
        %s382 = smul.addr %s381, 256
        %s383 = scalar_lea.vmem [#allocation3], %s382
        %p384 = pneg %p49
        %p385 = pneg %p46
        %p386 = pneg %p70
        %p387 = pneg %p67
        %p388 = pneg %p91
        %p389 = pneg %p88
        %p390 = pneg %p112
        %p391 = pneg %p109
        %p392 = pneg %p133
        %p393 = pneg %p130
        %p394 = pneg %p154
        %p395 = pneg %p151
        %p396 = pneg %p175
        %p397 = pneg %p172
        %p398 = pneg %p196
        %p399 = pneg %p193
        %p400 = pneg %p217
        %p401 = pneg %p214
        %p402 = pneg %p243
        %p403 = pneg %p240
        %s404 = sand.u32 %s230, 1
        %s405 = scalar_lea.sflag [#allocation5], %s404
        %s406 = sand.u32 %s230, 1
        %s407 = smul.addr %s406, 256
        %s408 = scalar_lea.vmem [#allocation12], %s407
        %v410 = vld [vmem:[%s358] sm:$0xff]
        %v411 = vld [vmem:[%s358 + $0x8] sm:$0xff]
        %v412 = vld [vmem:[%s358 + $0x10] sm:$0xff]
        %v413 = vld [vmem:[%s358 + $0x18] sm:$0xff]
        %v414 = vld [vmem:[%s358 + $0x20] sm:$0xff]
        %v415 = vld [vmem:[%s358 + $0x28] sm:$0xff]
        %v416 = vld [vmem:[%s358 + $0x30] sm:$0xff]
        %v417 = vld [vmem:[%s358 + $0x38] sm:$0xff]
        %v418 = vld [vmem:[%s358 + $0x40] sm:$0xff]
        %v419 = vld [vmem:[%s358 + $0x48] sm:$0xff]
        %v420 = vld [vmem:[%s358 + $0x50] sm:$0xff]
        %v421 = vld [vmem:[%s358 + $0x58] sm:$0xff]
        %v422 = vld [vmem:[%s358 + $0x60] sm:$0xff]
        %v423 = vld [vmem:[%s358 + $0x68] sm:$0xff]
        %v424 = vld [vmem:[%s358 + $0x70] sm:$0xff]
        %v425 = vld [vmem:[%s358 + $0x78] sm:$0xff]
        %v426 = vld [vmem:[%s358 + $0x80] sm:$0xff]
        %v427 = vld [vmem:[%s358 + $0x88] sm:$0xff]
        %v428 = vld [vmem:[%s358 + $0x90] sm:$0xff]
        %v429 = vld [vmem:[%s358 + $0x98] sm:$0xff]
        %v430 = vld [vmem:[%s358 + $0xa0] sm:$0xff]
        %v431 = vld [vmem:[%s358 + $0xa8] sm:$0xff]
        %v432 = vld [vmem:[%s358 + $0xb0] sm:$0xff]
        %v433 = vld [vmem:[%s358 + $0xb8] sm:$0xff]
        %v434 = vld [vmem:[%s358 + $0xc0] sm:$0xff]
        %v435 = vld [vmem:[%s358 + $0xc8] sm:$0xff]
        %v436 = vld [vmem:[%s358 + $0xd0] sm:$0xff]
        %v437 = vld [vmem:[%s358 + $0xd8] sm:$0xff]
        %v438 = vld [vmem:[%s358 + $0xe0] sm:$0xff]
        %v439 = vld [vmem:[%s358 + $0xe8] sm:$0xff]
        %v440 = vld [vmem:[%s358 + $0xf0] sm:$0xff]
        %v441 = vld [vmem:[%s358 + $0xf8] sm:$0xff]
        %v442 = vpack.c.bf16 %v411, %v410
        %v443 = vpack.c.bf16 %v413, %v412
        %v444 = vpack.c.bf16 %v415, %v414
        %v445 = vpack.c.bf16 %v417, %v416
        %v446 = vpack.c.bf16 %v419, %v418
        %v447 = vpack.c.bf16 %v421, %v420
        %v448 = vpack.c.bf16 %v423, %v422
        %v449 = vpack.c.bf16 %v425, %v424
        %v450 = vpack.c.bf16 %v427, %v426
        %v451 = vpack.c.bf16 %v429, %v428
        %v452 = vpack.c.bf16 %v431, %v430
        %v453 = vpack.c.bf16 %v433, %v432
        %v454 = vpack.c.bf16 %v435, %v434
        %v455 = vpack.c.bf16 %v437, %v436
        %v456 = vpack.c.bf16 %v439, %v438
        %v457 = vpack.c.bf16 %v441, %v440
        %v458 = vld [vmem:[#allocation6] sm:$0xf]
        %v459 = vld [vmem:[#allocation6 + $0x4] sm:$0xf]
        %v460 = vld [vmem:[#allocation6 + $0x8] sm:$0xf]
        %v461 = vld [vmem:[#allocation6 + $0xc] sm:$0xf]
        %v462 = vld [vmem:[#allocation6 + $0x10] sm:$0xf]
        %v463 = vld [vmem:[#allocation6 + $0x14] sm:$0xf]
        %v464 = vld [vmem:[#allocation6 + $0x18] sm:$0xf]
        %v465 = vld [vmem:[#allocation6 + $0x1c] sm:$0xf]
        %v466 = vld [vmem:[#allocation6 + $0x20] sm:$0xf]
        %v467 = vld [vmem:[#allocation6 + $0x24] sm:$0xf]
        %v468 = vld [vmem:[#allocation6 + $0x28] sm:$0xf]
        %v469 = vld [vmem:[#allocation6 + $0x2c] sm:$0xf]
        %v470 = vld [vmem:[#allocation6 + $0x30] sm:$0xf]
        %v471 = vld [vmem:[#allocation6 + $0x34] sm:$0xf]
        %v472 = vld [vmem:[#allocation6 + $0x38] sm:$0xf]
        %v473 = vld [vmem:[#allocation6 + $0x3c] sm:$0xf]
        %v474 = vld [vmem:[%s2] sm:$0x1]
        %v476 = vlaneseq
        %v477 = vshrl.u32 %v476, 7
        %v478 = vsub.s32 0, %v477
        %v479 = vrot.slane %v474, %v478
        %v497 = vunpack.c.l.b16 %v458
        %v498 = vunpack.c.l.b16 %v459
        %v499 = vunpack.c.l.b16 %v460
        %v500 = vunpack.c.l.b16 %v461
        %v501 = vunpack.c.l.b16 %v462
        %v502 = vunpack.c.l.b16 %v463
        %v503 = vunpack.c.l.b16 %v464
        %v504 = vunpack.c.l.b16 %v465
        %v505 = vunpack.c.l.b16 %v466
        %v506 = vunpack.c.l.b16 %v467
        %v507 = vunpack.c.l.b16 %v468
        %v508 = vunpack.c.l.b16 %v469
        %v509 = vunpack.c.l.b16 %v470
        %v510 = vunpack.c.l.b16 %v471
        %v511 = vunpack.c.l.b16 %v472
        %v512 = vunpack.c.l.b16 %v473
        %v513 = vpack.c.b16 %v498, %v497
        %v514 = vpack.c.b16 %v500, %v499
        %v515 = vpack.c.b16 %v502, %v501
        %v516 = vpack.c.b16 %v504, %v503
        %v517 = vpack.c.b16 %v506, %v505
        %v518 = vpack.c.b16 %v508, %v507
        %v519 = vpack.c.b16 %v510, %v509
        %v520 = vpack.c.b16 %v512, %v511
        %529 = vmatprep.subr.bf16.mxu0 0
        %530 = vmatpush1.bf16.msra.mxu0 %v513
        %531 = vmatprep.subr.bf16.mxu0 0
        %532 = vmatpush1.bf16.msra.mxu0 %v514
        %533 = vmatprep.subr.bf16.mxu0 0
        %534 = vmatpush1.bf16.msra.mxu0 %v515
        %535 = vmatprep.subr.bf16.mxu0 0
        %536 = vmatpush1.bf16.msra.mxu0 %v516
        %537 = vmatprep.subr.bf16.mxu0 0
        %538 = vmatpush1.bf16.msra.mxu0 %v517
        %539 = vmatprep.subr.bf16.mxu0 0
        %540 = vmatpush1.bf16.msra.mxu0 %v518
        %541 = vmatprep.subr.bf16.mxu0 0
        %542 = vmatpush1.bf16.msra.mxu0 %v519
        %543 = vmatprep.subr.bf16.mxu0 0
        %544 = vmatpush1.bf16.msra.mxu0 %v520
        %545 = vmatprep.subr.bf16.mxu0 0
        %546 = vmatpush1.bf16.msra.mxu0 0
        %547 = vmatprep.subr.bf16.mxu0 0
        %548 = vmatpush1.bf16.msra.mxu0 0
        %549 = vmatprep.subr.bf16.mxu0 0
        %550 = vmatpush1.bf16.msra.mxu0 0
        %551 = vmatprep.subr.bf16.mxu0 0
        %552 = vmatpush1.bf16.msra.mxu0 0
        %553 = vmatprep.subr.bf16.mxu0 0
        %554 = vmatpush1.bf16.msra.mxu0 0
        %555 = vmatprep.subr.bf16.mxu0 0
        %556 = vmatpush1.bf16.msra.mxu0 0
        %557 = vmatprep.subr.bf16.mxu0 0
        %558 = vmatpush1.bf16.msra.mxu0 0
        %559 = vmatprep.subr.bf16.mxu0 0
        %560 = vmatpush1.bf16.msra.mxu0 0
        %561 = vmatprep.mubr.bf16.mxu0 0
        %562 = vmatmul.mubr.bf16.gmra.mrb[0].mxu0 %v442
        %v563 = vpop.f32.mrb[0].mxu0
        %v564 = vadd.f32 %v479, %v563
        %v565 = vpop.f32.mrb[0].mxu0
        %v566 = vpop.f32.mrb[0].mxu0
        %v567 = vadd.f32 %v479, %v566
        %v568 = vpop.f32.mrb[0].mxu0
        %569 = vmatprep.mubr.bf16.mxu0 0
        %570 = vmatmul.mubr.bf16.gmra.mrb[0].mxu0 %v443
        %v571 = vpop.f32.mrb[0].mxu0
        %v572 = vadd.f32 %v479, %v571
        %v573 = vpop.f32.mrb[0].mxu0
        %v574 = vpop.f32.mrb[0].mxu0
        %v575 = vadd.f32 %v479, %v574
        %v576 = vpop.f32.mrb[0].mxu0
        %577 = vmatprep.mubr.bf16.mxu0 0
        %578 = vmatmul.mubr.bf16.gmra.mrb[0].mxu0 %v444
        %v579 = vpop.f32.mrb[0].mxu0
        %v580 = vadd.f32 %v479, %v579
        %v581 = vpop.f32.mrb[0].mxu0
        %v582 = vpop.f32.mrb[0].mxu0
        %v583 = vadd.f32 %v479, %v582
        %v584 = vpop.f32.mrb[0].mxu0
        %585 = vmatprep.mubr.bf16.mxu0 0
        %586 = vmatmul.mubr.bf16.gmra.mrb[0].mxu0 %v445
        %v587 = vpop.f32.mrb[0].mxu0
        %v588 = vadd.f32 %v479, %v587
        %v589 = vpop.f32.mrb[0].mxu0
        %v590 = vpop.f32.mrb[0].mxu0
        %v591 = vadd.f32 %v479, %v590
        %v592 = vpop.f32.mrb[0].mxu0
        %593 = vmatprep.mubr.bf16.mxu0 0
        %594 = vmatmul.mubr.bf16.gmra.mrb[0].mxu0 %v446
        %v595 = vpop.f32.mrb[0].mxu0
        %v596 = vadd.f32 %v479, %v595
        %v597 = vpop.f32.mrb[0].mxu0
        %v598 = vpop.f32.mrb[0].mxu0
        %v599 = vadd.f32 %v479, %v598
        %v600 = vpop.f32.mrb[0].mxu0
        %601 = vmatprep.mubr.bf16.mxu0 0
        %602 = vmatmul.mubr.bf16.gmra.mrb[0].mxu0 %v447
        %v603 = vpop.f32.mrb[0].mxu0
        %v604 = vadd.f32 %v479, %v603
        %v605 = vpop.f32.mrb[0].mxu0
        %v606 = vpop.f32.mrb[0].mxu0
        %v607 = vadd.f32 %v479, %v606
        %v608 = vpop.f32.mrb[0].mxu0
        %609 = vmatprep.mubr.bf16.mxu0 0
        %610 = vmatmul.mubr.bf16.gmra.mrb[0].mxu0 %v448
        %v611 = vpop.f32.mrb[0].mxu0
        %v612 = vadd.f32 %v479, %v611
        %v613 = vpop.f32.mrb[0].mxu0
        %v614 = vpop.f32.mrb[0].mxu0
        %v615 = vadd.f32 %v479, %v614
        %v616 = vpop.f32.mrb[0].mxu0
        %617 = vmatprep.mubr.bf16.mxu0 0
        %618 = vmatmul.mubr.bf16.gmra.mrb[0].mxu0 %v449
        %v619 = vpop.f32.mrb[0].mxu0
        %v620 = vadd.f32 %v479, %v619
        %v621 = vpop.f32.mrb[0].mxu0
        %v622 = vpop.f32.mrb[0].mxu0
        %v623 = vadd.f32 %v479, %v622
        %v624 = vpop.f32.mrb[0].mxu0
        %625 = vmatprep.mubr.bf16.mxu0 0
        %626 = vmatmul.mubr.bf16.gmra.mrb[0].mxu0 %v450
        %v627 = vpop.f32.mrb[0].mxu0
        %v628 = vadd.f32 %v479, %v627
        %v629 = vpop.f32.mrb[0].mxu0
        %v630 = vpop.f32.mrb[0].mxu0
        %v631 = vadd.f32 %v479, %v630
        %v632 = vpop.f32.mrb[0].mxu0
        %633 = vmatprep.mubr.bf16.mxu0 0
        %634 = vmatmul.mubr.bf16.gmra.mrb[0].mxu0 %v451
        %v635 = vpop.f32.mrb[0].mxu0
        %v636 = vadd.f32 %v479, %v635
        %v637 = vpop.f32.mrb[0].mxu0
        %v638 = vpop.f32.mrb[0].mxu0
        %v639 = vadd.f32 %v479, %v638
        %v640 = vpop.f32.mrb[0].mxu0
        %641 = vmatprep.mubr.bf16.mxu0 0
        %642 = vmatmul.mubr.bf16.gmra.mrb[0].mxu0 %v452
        %v643 = vpop.f32.mrb[0].mxu0
        %v644 = vadd.f32 %v479, %v643
        %v645 = vpop.f32.mrb[0].mxu0
        %v646 = vpop.f32.mrb[0].mxu0
        %v647 = vadd.f32 %v479, %v646
        %v648 = vpop.f32.mrb[0].mxu0
        %649 = vmatprep.mubr.bf16.mxu0 0
        %650 = vmatmul.mubr.bf16.gmra.mrb[0].mxu0 %v453
        %v651 = vpop.f32.mrb[0].mxu0
        %v652 = vadd.f32 %v479, %v651
        %v653 = vpop.f32.mrb[0].mxu0
        %v654 = vpop.f32.mrb[0].mxu0
        %v655 = vadd.f32 %v479, %v654
        %v656 = vpop.f32.mrb[0].mxu0
        %657 = vmatprep.mubr.bf16.mxu0 0
        %658 = vmatmul.mubr.bf16.gmra.mrb[0].mxu0 %v454
        %v659 = vpop.f32.mrb[0].mxu0
        %v660 = vadd.f32 %v479, %v659
        %v661 = vpop.f32.mrb[0].mxu0
        %v662 = vpop.f32.mrb[0].mxu0
        %v663 = vadd.f32 %v479, %v662
        %v664 = vpop.f32.mrb[0].mxu0
        %665 = vmatprep.mubr.bf16.mxu0 0
        %666 = vmatmul.mubr.bf16.gmra.mrb[0].mxu0 %v455
        %v667 = vpop.f32.mrb[0].mxu0
        %v668 = vadd.f32 %v479, %v667
        %v669 = vpop.f32.mrb[0].mxu0
        %v670 = vpop.f32.mrb[0].mxu0
        %v671 = vadd.f32 %v479, %v670
        %v672 = vpop.f32.mrb[0].mxu0
        %673 = vmatprep.mubr.bf16.mxu0 0
        %674 = vmatmul.mubr.bf16.gmra.mrb[0].mxu0 %v456
        %v675 = vpop.f32.mrb[0].mxu0
        %v676 = vadd.f32 %v479, %v675
        %v677 = vpop.f32.mrb[0].mxu0
        %v678 = vpop.f32.mrb[0].mxu0
        %v679 = vadd.f32 %v479, %v678
        %v680 = vpop.f32.mrb[0].mxu0
        %681 = vmatprep.mubr.bf16.mxu0 0
        %682 = vmatmul.mubr.bf16.gmra.mrb[0].mxu0 %v457
        %v683 = vpop.f32.mrb[0].mxu0
        %v684 = vadd.f32 %v479, %v683
        %v685 = vpop.f32.mrb[0].mxu0
        %v686 = vpop.f32.mrb[0].mxu0
        %v687 = vadd.f32 %v479, %v686
        %v688 = vpop.f32.mrb[0].mxu0
        %689 = vdwg.mxu0
        %v690 = vmax.f32 %v564, 0.0
        %v691 = vmax.f32 %v567, 0.0
        %v692 = vmax.f32 %v572, 0.0
        %v693 = vmax.f32 %v575, 0.0
        %v694 = vmax.f32 %v580, 0.0
        %v695 = vmax.f32 %v583, 0.0
        %v696 = vmax.f32 %v588, 0.0
        %v697 = vmax.f32 %v591, 0.0
        %v698 = vmax.f32 %v596, 0.0
        %v699 = vmax.f32 %v599, 0.0
        %v700 = vmax.f32 %v604, 0.0
        %v701 = vmax.f32 %v607, 0.0
        %v702 = vmax.f32 %v612, 0.0
        %v703 = vmax.f32 %v615, 0.0
        %v704 = vmax.f32 %v620, 0.0
        %v705 = vmax.f32 %v623, 0.0
        %v706 = vmax.f32 %v628, 0.0
        %v707 = vmax.f32 %v631, 0.0
        %v708 = vmax.f32 %v636, 0.0
        %v709 = vmax.f32 %v639, 0.0
        %v710 = vmax.f32 %v644, 0.0
        %v711 = vmax.f32 %v647, 0.0
        %v712 = vmax.f32 %v652, 0.0
        %v713 = vmax.f32 %v655, 0.0
        %v714 = vmax.f32 %v660, 0.0
        %v715 = vmax.f32 %v663, 0.0
        %v716 = vmax.f32 %v668, 0.0
        %v717 = vmax.f32 %v671, 0.0
        %v718 = vmax.f32 %v676, 0.0
        %v719 = vmax.f32 %v679, 0.0
        %v720 = vmax.f32 %v684, 0.0
        %v721 = vmax.f32 %v687, 0.0
        %722 = vst [vmem:[#allocation2] sm:$0xff] 0.0
        %723 = vst [vmem:[#allocation2 + $0x8] sm:$0xff] 0.0
        %724 = vst [vmem:[#allocation2 + $0x10] sm:$0x3] 0.0
        %725 = vst [vmem:[#allocation2 + $0x18] sm:$0xff] 0.0
        %726 = vst [vmem:[#allocation2 + $0x20] sm:$0xff] 0.0
        %727 = vst [vmem:[#allocation2 + $0x28] sm:$0x3] 0.0
        %728 = vst [vmem:[#allocation2 + $0x30] sm:$0xff] 0.0
        %729 = vst [vmem:[#allocation2 + $0x38] sm:$0xff] 0.0
        %730 = vst [vmem:[#allocation2 + $0x40] sm:$0x3] 0.0
        %731 = vst [vmem:[#allocation2 + $0x48] sm:$0xff] 0.0
        %732 = vst [vmem:[#allocation2 + $0x50] sm:$0xff] 0.0
        %733 = vst [vmem:[#allocation2 + $0x58] sm:$0x3] 0.0
        %734 = vst [vmem:[#allocation2 + $0x60] sm:$0xff] 0.0
        %735 = vst [vmem:[#allocation2 + $0x68] sm:$0xff] 0.0
        %736 = vst [vmem:[#allocation2 + $0x70] sm:$0x3] 0.0
        %737 = vst [vmem:[#allocation2 + $0x78] sm:$0xff] 0.0
        %738 = vst [vmem:[#allocation2 + $0x80] sm:$0xff] 0.0
        %739 = vst [vmem:[#allocation2 + $0x88] sm:$0x3] 0.0
        %740 = vst [vmem:[#allocation2 + $0x90] sm:$0xff] 0.0
        %741 = vst [vmem:[#allocation2 + $0x98] sm:$0xff] 0.0
        %742 = vst [vmem:[#allocation2 + $0xa0] sm:$0x3] 0.0
        %743 = vst [vmem:[#allocation2 + $0xa8] sm:$0xff] 0.0
        %744 = vst [vmem:[#allocation2 + $0xb0] sm:$0xff] 0.0
        %745 = vst [vmem:[#allocation2 + $0xb8] sm:$0x3] 0.0
        %746 = vst [vmem:[#allocation2 + $0xc0] sm:$0xff] 0.0
        %747 = vst [vmem:[#allocation2 + $0xc8] sm:$0xff] 0.0
        %748 = vst [vmem:[#allocation2 + $0xd0] sm:$0x3] 0.0
        %749 = vst [vmem:[#allocation2 + $0xd8] sm:$0xff] 0.0
        %750 = vst [vmem:[#allocation2 + $0xe0] sm:$0xff] 0.0
        %751 = vst [vmem:[#allocation2 + $0xe8] sm:$0x3] 0.0
        %752 = vst [vmem:[#allocation2 + $0xf0] sm:$0xff] 0.0
        %753 = vst [vmem:[#allocation2 + $0xf8] sm:$0xff] 0.0
        %754 = vst [vmem:[#allocation2 + $0x100] sm:$0x3] 0.0
        %755 = vst [vmem:[#allocation2 + $0x108] sm:$0xff] 0.0
        %756 = vst [vmem:[#allocation2 + $0x110] sm:$0xff] 0.0
        %757 = vst [vmem:[#allocation2 + $0x118] sm:$0x3] 0.0
        %758 = vst [vmem:[#allocation2 + $0x120] sm:$0xff] 0.0
        %759 = vst [vmem:[#allocation2 + $0x128] sm:$0xff] 0.0
        %760 = vst [vmem:[#allocation2 + $0x130] sm:$0x3] 0.0
        %761 = vst [vmem:[#allocation2 + $0x138] sm:$0xff] 0.0
        %762 = vst [vmem:[#allocation2 + $0x140] sm:$0xff] 0.0
        %763 = vst [vmem:[#allocation2 + $0x148] sm:$0x3] 0.0
        %764 = vst [vmem:[#allocation2 + $0x150] sm:$0xff] 0.0
        %765 = vst [vmem:[#allocation2 + $0x158] sm:$0xff] 0.0
        %766 = vst [vmem:[#allocation2 + $0x160] sm:$0x3] 0.0
        %767 = vst [vmem:[#allocation2 + $0x168] sm:$0xff] 0.0
        %768 = vst [vmem:[#allocation2 + $0x170] sm:$0xff] 0.0
        %769 = vst [vmem:[#allocation2 + $0x178] sm:$0x3] 0.0
        %770 = vst [vmem:[#allocation2 + $0x180] sm:$0xff] 0.0
        %771 = vst [vmem:[#allocation2 + $0x188] sm:$0xff] 0.0
        %772 = vst [vmem:[#allocation2 + $0x190] sm:$0x3] 0.0
        %773 = vst [vmem:[#allocation2 + $0x198] sm:$0xff] 0.0
        %774 = vst [vmem:[#allocation2 + $0x1a0] sm:$0xff] 0.0
        %775 = vst [vmem:[#allocation2 + $0x1a8] sm:$0x3] 0.0
        %s776 = scalar_lea.vmem [#allocation2], 24
        %777 = vst [vmem:[%s776 + $0x1] sm:$0xff] %v690
        %778 = vst [vmem:[%s776 + $0x9] sm:$0xff] %v691
        %779 = vst [vmem:[%s776 + $0x19] sm:$0xff] %v692
        %780 = vst [vmem:[%s776 + $0x21] sm:$0xff] %v693
        %781 = vst [vmem:[%s776 + $0x31] sm:$0xff] %v694
        %782 = vst [vmem:[%s776 + $0x39] sm:$0xff] %v695
        %783 = vst [vmem:[%s776 + $0x49] sm:$0xff] %v696
        %784 = vst [vmem:[%s776 + $0x51] sm:$0xff] %v697
        %785 = vst [vmem:[%s776 + $0x61] sm:$0xff] %v698
        %786 = vst [vmem:[%s776 + $0x69] sm:$0xff] %v699
        %787 = vst [vmem:[%s776 + $0x79] sm:$0xff] %v700
        %788 = vst [vmem:[%s776 + $0x81] sm:$0xff] %v701
        %789 = vst [vmem:[%s776 + $0x91] sm:$0xff] %v702
        %790 = vst [vmem:[%s776 + $0x99] sm:$0xff] %v703
        %791 = vst [vmem:[%s776 + $0xa9] sm:$0xff] %v704
        %792 = vst [vmem:[%s776 + $0xb1] sm:$0xff] %v705
        %793 = vst [vmem:[%s776 + $0xc1] sm:$0xff] %v706
        %794 = vst [vmem:[%s776 + $0xc9] sm:$0xff] %v707
        %795 = vst [vmem:[%s776 + $0xd9] sm:$0xff] %v708
        %796 = vst [vmem:[%s776 + $0xe1] sm:$0xff] %v709
        %797 = vst [vmem:[%s776 + $0xf1] sm:$0xff] %v710
        %798 = vst [vmem:[%s776 + $0xf9] sm:$0xff] %v711
        %799 = vst [vmem:[%s776 + $0x109] sm:$0xff] %v712
        %800 = vst [vmem:[%s776 + $0x111] sm:$0xff] %v713
        %801 = vst [vmem:[%s776 + $0x121] sm:$0xff] %v714
        %802 = vst [vmem:[%s776 + $0x129] sm:$0xff] %v715
        %803 = vst [vmem:[%s776 + $0x139] sm:$0xff] %v716
        %804 = vst [vmem:[%s776 + $0x141] sm:$0xff] %v717
        %805 = vst [vmem:[%s776 + $0x151] sm:$0xff] %v718
        %806 = vst [vmem:[%s776 + $0x159] sm:$0xff] %v719
        %807 = vst [vmem:[%s776 + $0x169] sm:$0xff] %v720
        %808 = vst [vmem:[%s776 + $0x171] sm:$0xff] %v721
        %v809 = vld [vmem:[#allocation8] sm:$0xff]
        %v810 = vld [vmem:[#allocation8 + $0x8] sm:$0x1]
        %v811 = vld [vmem:[#allocation2] sm:$0xff]
        %v812 = vld [vmem:[#allocation2 + $0x8] sm:$0xff]
        %v813 = vld [vmem:[#allocation2 + $0x18] sm:$0xff]
        %v814 = vld [vmem:[#allocation2 + $0x20] sm:$0xff]
        %v815 = vld [vmem:[#allocation2 + $0x30] sm:$0xff]
        %v816 = vld [vmem:[#allocation2 + $0x38] sm:$0xff]
        %v817 = vld [vmem:[#allocation2 + $0x48] sm:$0xff]
        %v818 = vld [vmem:[#allocation2 + $0x50] sm:$0xff]
        %v819 = vld [vmem:[#allocation2 + $0x60] sm:$0xff]
        %v820 = vld [vmem:[#allocation2 + $0x68] sm:$0xff]
        %v821 = vld [vmem:[#allocation2 + $0x78] sm:$0xff]
        %v822 = vld [vmem:[#allocation2 + $0x80] sm:$0xff]
        %v823 = vld [vmem:[#allocation2 + $0x90] sm:$0xff]
        %v824 = vld [vmem:[#allocation2 + $0x98] sm:$0xff]
        %v825 = vld [vmem:[#allocation2 + $0xa8] sm:$0xff]
        %v826 = vld [vmem:[#allocation2 + $0xb0] sm:$0xff]
        %v827 = vld [vmem:[#allocation2 + $0xc0] sm:$0xff]
        %v828 = vld [vmem:[#allocation2 + $0xc8] sm:$0xff]
        %v829 = vld [vmem:[#allocation2 + $0xd8] sm:$0xff]
        %v830 = vld [vmem:[#allocation2 + $0xe0] sm:$0xff]
        %v831 = vld [vmem:[#allocation2 + $0xf0] sm:$0xff]
        %v832 = vld [vmem:[#allocation2 + $0xf8] sm:$0xff]
        %v833 = vld [vmem:[#allocation2 + $0x108] sm:$0xff]
        %v834 = vld [vmem:[#allocation2 + $0x110] sm:$0xff]
        %v835 = vld [vmem:[#allocation2 + $0x120] sm:$0xff]
        %v836 = vld [vmem:[#allocation2 + $0x128] sm:$0xff]
        %v837 = vld [vmem:[#allocation2 + $0x138] sm:$0xff]
        %v838 = vld [vmem:[#allocation2 + $0x140] sm:$0xff]
        %v839 = vld [vmem:[#allocation2 + $0x150] sm:$0xff]
        %v840 = vld [vmem:[#allocation2 + $0x158] sm:$0xff]
        %v841 = vld [vmem:[#allocation2 + $0x168] sm:$0xff]
        %v842 = vld [vmem:[#allocation2 + $0x170] sm:$0xff]
        %v843 = vlaneseq
        %v844 = vshrl.u32 %v843, 7
        %v845 = vsub.s32 0, %v844
        %v846 = vrot.slane %v809, %v845
        %v847 = vmul.f32 %v811, %v846
        %v848 = vmul.f32 %v812, %v846
        %v849 = vmul.f32 %v813, %v846
        %v850 = vmul.f32 %v814, %v846
        %v851 = vmul.f32 %v815, %v846
        %v852 = vmul.f32 %v816, %v846
        %v853 = vmul.f32 %v817, %v846
        %v854 = vmul.f32 %v818, %v846
        %v855 = vmul.f32 %v819, %v846
        %v856 = vmul.f32 %v820, %v846
        %v857 = vmul.f32 %v821, %v846
        %v858 = vmul.f32 %v822, %v846
        %v859 = vmul.f32 %v823, %v846
        %v860 = vmul.f32 %v824, %v846
        %v861 = vmul.f32 %v825, %v846
        %v862 = vmul.f32 %v826, %v846
        %v863 = vmul.f32 %v827, %v846
        %v864 = vmul.f32 %v828, %v846
        %v865 = vmul.f32 %v829, %v846
        %v866 = vmul.f32 %v830, %v846
        %v867 = vmul.f32 %v831, %v846
        %v868 = vmul.f32 %v832, %v846
        %v869 = vmul.f32 %v833, %v846
        %v870 = vmul.f32 %v834, %v846
        %v871 = vmul.f32 %v835, %v846
        %v872 = vmul.f32 %v836, %v846
        %v873 = vmul.f32 %v837, %v846
        %v874 = vmul.f32 %v838, %v846
        %v875 = vmul.f32 %v839, %v846
        %v876 = vmul.f32 %v840, %v846
        %v877 = vmul.f32 %v841, %v846
        %v878 = vmul.f32 %v842, %v846
        %v879 = vadd.f32 %v847, 0.0
        %v880 = vadd.f32 %v848, 0.0
        %v881 = vadd.f32 %v849, 0.0
        %v882 = vadd.f32 %v850, 0.0
        %v883 = vadd.f32 %v851, 0.0
        %v884 = vadd.f32 %v852, 0.0
        %v885 = vadd.f32 %v853, 0.0
        %v886 = vadd.f32 %v854, 0.0
        %v887 = vadd.f32 %v855, 0.0
        %v888 = vadd.f32 %v856, 0.0
        %v889 = vadd.f32 %v857, 0.0
        %v890 = vadd.f32 %v858, 0.0
        %v891 = vadd.f32 %v859, 0.0
        %v892 = vadd.f32 %v860, 0.0
        %v893 = vadd.f32 %v861, 0.0
        %v894 = vadd.f32 %v862, 0.0
        %v895 = vadd.f32 %v863, 0.0
        %v896 = vadd.f32 %v864, 0.0
        %v897 = vadd.f32 %v865, 0.0
        %v898 = vadd.f32 %v866, 0.0
        %v899 = vadd.f32 %v867, 0.0
        %v900 = vadd.f32 %v868, 0.0
        %v901 = vadd.f32 %v869, 0.0
        %v902 = vadd.f32 %v870, 0.0
        %v903 = vadd.f32 %v871, 0.0
        %v904 = vadd.f32 %v872, 0.0
        %v905 = vadd.f32 %v873, 0.0
        %v906 = vadd.f32 %v874, 0.0
        %v907 = vadd.f32 %v875, 0.0
        %v908 = vadd.f32 %v876, 0.0
        %v909 = vadd.f32 %v877, 0.0
        %v910 = vadd.f32 %v878, 0.0
        %v911 = vld [vmem:[#allocation2 + $0x1] sm:$0xff]
        %v912 = vld [vmem:[#allocation2 + $0x9] sm:$0xff]
        %v913 = vld [vmem:[#allocation2 + $0x19] sm:$0xff]
        %v914 = vld [vmem:[#allocation2 + $0x21] sm:$0xff]
        %v915 = vld [vmem:[#allocation2 + $0x31] sm:$0xff]
        %v916 = vld [vmem:[#allocation2 + $0x39] sm:$0xff]
        %v917 = vld [vmem:[#allocation2 + $0x49] sm:$0xff]
        %v918 = vld [vmem:[#allocation2 + $0x51] sm:$0xff]
        %v919 = vld [vmem:[#allocation2 + $0x61] sm:$0xff]
        %v920 = vld [vmem:[#allocation2 + $0x69] sm:$0xff]
        %v921 = vld [vmem:[#allocation2 + $0x79] sm:$0xff]
        %v922 = vld [vmem:[#allocation2 + $0x81] sm:$0xff]
        %v923 = vld [vmem:[#allocation2 + $0x91] sm:$0xff]
        %v924 = vld [vmem:[#allocation2 + $0x99] sm:$0xff]
        %v925 = vld [vmem:[#allocation2 + $0xa9] sm:$0xff]
        %v926 = vld [vmem:[#allocation2 + $0xb1] sm:$0xff]
        %v927 = vld [vmem:[#allocation2 + $0xc1] sm:$0xff]
        %v928 = vld [vmem:[#allocation2 + $0xc9] sm:$0xff]
        %v929 = vld [vmem:[#allocation2 + $0xd9] sm:$0xff]
        %v930 = vld [vmem:[#allocation2 + $0xe1] sm:$0xff]
        %v931 = vld [vmem:[#allocation2 + $0xf1] sm:$0xff]
        %v932 = vld [vmem:[#allocation2 + $0xf9] sm:$0xff]
        %v933 = vld [vmem:[#allocation2 + $0x109] sm:$0xff]
        %v934 = vld [vmem:[#allocation2 + $0x111] sm:$0xff]
        %v935 = vld [vmem:[#allocation2 + $0x121] sm:$0xff]
        %v936 = vld [vmem:[#allocation2 + $0x129] sm:$0xff]
        %v937 = vld [vmem:[#allocation2 + $0x139] sm:$0xff]
        %v938 = vld [vmem:[#allocation2 + $0x141] sm:$0xff]
        %v939 = vld [vmem:[#allocation2 + $0x151] sm:$0xff]
        %v940 = vld [vmem:[#allocation2 + $0x159] sm:$0xff]
        %v941 = vld [vmem:[#allocation2 + $0x169] sm:$0xff]
        %v942 = vld [vmem:[#allocation2 + $0x171] sm:$0xff]
        %v943 = vlaneseq
        %v944 = vshrl.u32 %v943, 7
        %v945 = vsub.s32 1, %v944
        %v946 = vrot.slane %v809, %v945
        %v947 = vmul.f32 %v911, %v946
        %v948 = vmul.f32 %v912, %v946
        %v949 = vmul.f32 %v913, %v946
        %v950 = vmul.f32 %v914, %v946
        %v951 = vmul.f32 %v915, %v946
        %v952 = vmul.f32 %v916, %v946
        %v953 = vmul.f32 %v917, %v946
        %v954 = vmul.f32 %v918, %v946
        %v955 = vmul.f32 %v919, %v946
        %v956 = vmul.f32 %v920, %v946
        %v957 = vmul.f32 %v921, %v946
        %v958 = vmul.f32 %v922, %v946
        %v959 = vmul.f32 %v923, %v946
        %v960 = vmul.f32 %v924, %v946
        %v961 = vmul.f32 %v925, %v946
        %v962 = vmul.f32 %v926, %v946
        %v963 = vmul.f32 %v927, %v946
        %v964 = vmul.f32 %v928, %v946
        %v965 = vmul.f32 %v929, %v946
        %v966 = vmul.f32 %v930, %v946
        %v967 = vmul.f32 %v931, %v946
        %v968 = vmul.f32 %v932, %v946
        %v969 = vmul.f32 %v933, %v946
        %v970 = vmul.f32 %v934, %v946
        %v971 = vmul.f32 %v935, %v946
        %v972 = vmul.f32 %v936, %v946
        %v973 = vmul.f32 %v937, %v946
        %v974 = vmul.f32 %v938, %v946
        %v975 = vmul.f32 %v939, %v946
        %v976 = vmul.f32 %v940, %v946
        %v977 = vmul.f32 %v941, %v946
        %v978 = vmul.f32 %v942, %v946
        %v979 = vadd.f32 %v879, %v947
        %v980 = vadd.f32 %v880, %v948
        %v981 = vadd.f32 %v881, %v949
        %v982 = vadd.f32 %v882, %v950
        %v983 = vadd.f32 %v883, %v951
        %v984 = vadd.f32 %v884, %v952
        %v985 = vadd.f32 %v885, %v953
        %v986 = vadd.f32 %v886, %v954
        %v987 = vadd.f32 %v887, %v955
        %v988 = vadd.f32 %v888, %v956
        %v989 = vadd.f32 %v889, %v957
        %v990 = vadd.f32 %v890, %v958
        %v991 = vadd.f32 %v891, %v959
        %v992 = vadd.f32 %v892, %v960
        %v993 = vadd.f32 %v893, %v961
        %v994 = vadd.f32 %v894, %v962
        %v995 = vadd.f32 %v895, %v963
        %v996 = vadd.f32 %v896, %v964
        %v997 = vadd.f32 %v897, %v965
        %v998 = vadd.f32 %v898, %v966
        %v999 = vadd.f32 %v899, %v967
        %v1000 = vadd.f32 %v900, %v968
        %v1001 = vadd.f32 %v901, %v969
        %v1002 = vadd.f32 %v902, %v970
        %v1003 = vadd.f32 %v903, %v971
        %v1004 = vadd.f32 %v904, %v972
        %v1005 = vadd.f32 %v905, %v973
        %v1006 = vadd.f32 %v906, %v974
        %v1007 = vadd.f32 %v907, %v975
        %v1008 = vadd.f32 %v908, %v976
        %v1009 = vadd.f32 %v909, %v977
        %v1010 = vadd.f32 %v910, %v978
        %v1011 = vld [vmem:[#allocation2 + $0x2] sm:$0xff]
        %v1012 = vld [vmem:[#allocation2 + $0xa] sm:$0xff]
        %v1013 = vld [vmem:[#allocation2 + $0x1a] sm:$0xff]
        %v1014 = vld [vmem:[#allocation2 + $0x22] sm:$0xff]
        %v1015 = vld [vmem:[#allocation2 + $0x32] sm:$0xff]
        %v1016 = vld [vmem:[#allocation2 + $0x3a] sm:$0xff]
        %v1017 = vld [vmem:[#allocation2 + $0x4a] sm:$0xff]
        %v1018 = vld [vmem:[#allocation2 + $0x52] sm:$0xff]
        %v1019 = vld [vmem:[#allocation2 + $0x62] sm:$0xff]
        %v1020 = vld [vmem:[#allocation2 + $0x6a] sm:$0xff]
        %v1021 = vld [vmem:[#allocation2 + $0x7a] sm:$0xff]
        %v1022 = vld [vmem:[#allocation2 + $0x82] sm:$0xff]
        %v1023 = vld [vmem:[#allocation2 + $0x92] sm:$0xff]
        %v1024 = vld [vmem:[#allocation2 + $0x9a] sm:$0xff]
        %v1025 = vld [vmem:[#allocation2 + $0xaa] sm:$0xff]
        %v1026 = vld [vmem:[#allocation2 + $0xb2] sm:$0xff]
        %v1027 = vld [vmem:[#allocation2 + $0xc2] sm:$0xff]
        %v1028 = vld [vmem:[#allocation2 + $0xca] sm:$0xff]
        %v1029 = vld [vmem:[#allocation2 + $0xda] sm:$0xff]
        %v1030 = vld [vmem:[#allocation2 + $0xe2] sm:$0xff]
        %v1031 = vld [vmem:[#allocation2 + $0xf2] sm:$0xff]
        %v1032 = vld [vmem:[#allocation2 + $0xfa] sm:$0xff]
        %v1033 = vld [vmem:[#allocation2 + $0x10a] sm:$0xff]
        %v1034 = vld [vmem:[#allocation2 + $0x112] sm:$0xff]
        %v1035 = vld [vmem:[#allocation2 + $0x122] sm:$0xff]
        %v1036 = vld [vmem:[#allocation2 + $0x12a] sm:$0xff]
        %v1037 = vld [vmem:[#allocation2 + $0x13a] sm:$0xff]
        %v1038 = vld [vmem:[#allocation2 + $0x142] sm:$0xff]
        %v1039 = vld [vmem:[#allocation2 + $0x152] sm:$0xff]
        %v1040 = vld [vmem:[#allocation2 + $0x15a] sm:$0xff]
        %v1041 = vld [vmem:[#allocation2 + $0x16a] sm:$0xff]
        %v1042 = vld [vmem:[#allocation2 + $0x172] sm:$0xff]
        %v1043 = vlaneseq
        %v1044 = vshrl.u32 %v1043, 7
        %v1045 = vsub.s32 2, %v1044
        %v1046 = vrot.slane %v809, %v1045
        %v1047 = vmul.f32 %v1011, %v1046
        %v1048 = vmul.f32 %v1012, %v1046
        %v1049 = vmul.f32 %v1013, %v1046
        %v1050 = vmul.f32 %v1014, %v1046
        %v1051 = vmul.f32 %v1015, %v1046
        %v1052 = vmul.f32 %v1016, %v1046
        %v1053 = vmul.f32 %v1017, %v1046
        %v1054 = vmul.f32 %v1018, %v1046
        %v1055 = vmul.f32 %v1019, %v1046
        %v1056 = vmul.f32 %v1020, %v1046
        %v1057 = vmul.f32 %v1021, %v1046
        %v1058 = vmul.f32 %v1022, %v1046
        %v1059 = vmul.f32 %v1023, %v1046
        %v1060 = vmul.f32 %v1024, %v1046
        %v1061 = vmul.f32 %v1025, %v1046
        %v1062 = vmul.f32 %v1026, %v1046
        %v1063 = vmul.f32 %v1027, %v1046
        %v1064 = vmul.f32 %v1028, %v1046
        %v1065 = vmul.f32 %v1029, %v1046
        %v1066 = vmul.f32 %v1030, %v1046
        %v1067 = vmul.f32 %v1031, %v1046
        %v1068 = vmul.f32 %v1032, %v1046
        %v1069 = vmul.f32 %v1033, %v1046
        %v1070 = vmul.f32 %v1034, %v1046
        %v1071 = vmul.f32 %v1035, %v1046
        %v1072 = vmul.f32 %v1036, %v1046
        %v1073 = vmul.f32 %v1037, %v1046
        %v1074 = vmul.f32 %v1038, %v1046
        %v1075 = vmul.f32 %v1039, %v1046
        %v1076 = vmul.f32 %v1040, %v1046
        %v1077 = vmul.f32 %v1041, %v1046
        %v1078 = vmul.f32 %v1042, %v1046
        %v1079 = vadd.f32 %v979, %v1047
        %v1080 = vadd.f32 %v980, %v1048
        %v1081 = vadd.f32 %v981, %v1049
        %v1082 = vadd.f32 %v982, %v1050
        %v1083 = vadd.f32 %v983, %v1051
        %v1084 = vadd.f32 %v984, %v1052
        %v1085 = vadd.f32 %v985, %v1053
        %v1086 = vadd.f32 %v986, %v1054
        %v1087 = vadd.f32 %v987, %v1055
        %v1088 = vadd.f32 %v988, %v1056
        %v1089 = vadd.f32 %v989, %v1057
        %v1090 = vadd.f32 %v990, %v1058
        %v1091 = vadd.f32 %v991, %v1059
        %v1092 = vadd.f32 %v992, %v1060
        %v1093 = vadd.f32 %v993, %v1061
        %v1094 = vadd.f32 %v994, %v1062
        %v1095 = vadd.f32 %v995, %v1063
        %v1096 = vadd.f32 %v996, %v1064
        %v1097 = vadd.f32 %v997, %v1065
        %v1098 = vadd.f32 %v998, %v1066
        %v1099 = vadd.f32 %v999, %v1067
        %v1100 = vadd.f32 %v1000, %v1068
        %v1101 = vadd.f32 %v1001, %v1069
        %v1102 = vadd.f32 %v1002, %v1070
        %v1103 = vadd.f32 %v1003, %v1071
        %v1104 = vadd.f32 %v1004, %v1072
        %v1105 = vadd.f32 %v1005, %v1073
        %v1106 = vadd.f32 %v1006, %v1074
        %v1107 = vadd.f32 %v1007, %v1075
        %v1108 = vadd.f32 %v1008, %v1076
        %v1109 = vadd.f32 %v1009, %v1077
        %v1110 = vadd.f32 %v1010, %v1078
        %v1111 = vld [vmem:[%s776] sm:$0xff]
        %v1112 = vld [vmem:[%s776 + $0x8] sm:$0xff]
        %v1113 = vld [vmem:[%s776 + $0x18] sm:$0xff]
        %v1114 = vld [vmem:[%s776 + $0x20] sm:$0xff]
        %v1115 = vld [vmem:[%s776 + $0x30] sm:$0xff]
        %v1116 = vld [vmem:[%s776 + $0x38] sm:$0xff]
        %v1117 = vld [vmem:[%s776 + $0x48] sm:$0xff]
        %v1118 = vld [vmem:[%s776 + $0x50] sm:$0xff]
        %v1119 = vld [vmem:[%s776 + $0x60] sm:$0xff]
        %v1120 = vld [vmem:[%s776 + $0x68] sm:$0xff]
        %v1121 = vld [vmem:[%s776 + $0x78] sm:$0xff]
        %v1122 = vld [vmem:[%s776 + $0x80] sm:$0xff]
        %v1123 = vld [vmem:[%s776 + $0x90] sm:$0xff]
        %v1124 = vld [vmem:[%s776 + $0x98] sm:$0xff]
        %v1125 = vld [vmem:[%s776 + $0xa8] sm:$0xff]
        %v1126 = vld [vmem:[%s776 + $0xb0] sm:$0xff]
        %v1127 = vld [vmem:[%s776 + $0xc0] sm:$0xff]
        %v1128 = vld [vmem:[%s776 + $0xc8] sm:$0xff]
        %v1129 = vld [vmem:[%s776 + $0xd8] sm:$0xff]
        %v1130 = vld [vmem:[%s776 + $0xe0] sm:$0xff]
        %v1131 = vld [vmem:[%s776 + $0xf0] sm:$0xff]
        %v1132 = vld [vmem:[%s776 + $0xf8] sm:$0xff]
        %v1133 = vld [vmem:[%s776 + $0x108] sm:$0xff]
        %v1134 = vld [vmem:[%s776 + $0x110] sm:$0xff]
        %v1135 = vld [vmem:[%s776 + $0x120] sm:$0xff]
        %v1136 = vld [vmem:[%s776 + $0x128] sm:$0xff]
        %v1137 = vld [vmem:[%s776 + $0x138] sm:$0xff]
        %v1138 = vld [vmem:[%s776 + $0x140] sm:$0xff]
        %v1139 = vld [vmem:[%s776 + $0x150] sm:$0xff]
        %v1140 = vld [vmem:[%s776 + $0x158] sm:$0xff]
        %v1141 = vld [vmem:[%s776 + $0x168] sm:$0xff]
        %v1142 = vld [vmem:[%s776 + $0x170] sm:$0xff]
        %v1143 = vlaneseq
        %v1144 = vshrl.u32 %v1143, 7
        %v1145 = vsub.s32 3, %v1144
        %v1146 = vrot.slane %v809, %v1145
        %v1147 = vmul.f32 %v1111, %v1146
        %v1148 = vmul.f32 %v1112, %v1146
        %v1149 = vmul.f32 %v1113, %v1146
        %v1150 = vmul.f32 %v1114, %v1146
        %v1151 = vmul.f32 %v1115, %v1146
        %v1152 = vmul.f32 %v1116, %v1146
        %v1153 = vmul.f32 %v1117, %v1146
        %v1154 = vmul.f32 %v1118, %v1146
        %v1155 = vmul.f32 %v1119, %v1146
        %v1156 = vmul.f32 %v1120, %v1146
        %v1157 = vmul.f32 %v1121, %v1146
        %v1158 = vmul.f32 %v1122, %v1146
        %v1159 = vmul.f32 %v1123, %v1146
        %v1160 = vmul.f32 %v1124, %v1146
        %v1161 = vmul.f32 %v1125, %v1146
        %v1162 = vmul.f32 %v1126, %v1146
        %v1163 = vmul.f32 %v1127, %v1146
        %v1164 = vmul.f32 %v1128, %v1146
        %v1165 = vmul.f32 %v1129, %v1146
        %v1166 = vmul.f32 %v1130, %v1146
        %v1167 = vmul.f32 %v1131, %v1146
        %v1168 = vmul.f32 %v1132, %v1146
        %v1169 = vmul.f32 %v1133, %v1146
        %v1170 = vmul.f32 %v1134, %v1146
        %v1171 = vmul.f32 %v1135, %v1146
        %v1172 = vmul.f32 %v1136, %v1146
        %v1173 = vmul.f32 %v1137, %v1146
        %v1174 = vmul.f32 %v1138, %v1146
        %v1175 = vmul.f32 %v1139, %v1146
        %v1176 = vmul.f32 %v1140, %v1146
        %v1177 = vmul.f32 %v1141, %v1146
        %v1178 = vmul.f32 %v1142, %v1146
        %v1179 = vadd.f32 %v1079, %v1147
        %v1180 = vadd.f32 %v1080, %v1148
        %v1181 = vadd.f32 %v1081, %v1149
        %v1182 = vadd.f32 %v1082, %v1150
        %v1183 = vadd.f32 %v1083, %v1151
        %v1184 = vadd.f32 %v1084, %v1152
        %v1185 = vadd.f32 %v1085, %v1153
        %v1186 = vadd.f32 %v1086, %v1154
        %v1187 = vadd.f32 %v1087, %v1155
        %v1188 = vadd.f32 %v1088, %v1156
        %v1189 = vadd.f32 %v1089, %v1157
        %v1190 = vadd.f32 %v1090, %v1158
        %v1191 = vadd.f32 %v1091, %v1159
        %v1192 = vadd.f32 %v1092, %v1160
        %v1193 = vadd.f32 %v1093, %v1161
        %v1194 = vadd.f32 %v1094, %v1162
        %v1195 = vadd.f32 %v1095, %v1163
        %v1196 = vadd.f32 %v1096, %v1164
        %v1197 = vadd.f32 %v1097, %v1165
        %v1198 = vadd.f32 %v1098, %v1166
        %v1199 = vadd.f32 %v1099, %v1167
        %v1200 = vadd.f32 %v1100, %v1168
        %v1201 = vadd.f32 %v1101, %v1169
        %v1202 = vadd.f32 %v1102, %v1170
        %v1203 = vadd.f32 %v1103, %v1171
        %v1204 = vadd.f32 %v1104, %v1172
        %v1205 = vadd.f32 %v1105, %v1173
        %v1206 = vadd.f32 %v1106, %v1174
        %v1207 = vadd.f32 %v1107, %v1175
        %v1208 = vadd.f32 %v1108, %v1176
        %v1209 = vadd.f32 %v1109, %v1177
        %v1210 = vadd.f32 %v1110, %v1178
        %v1211 = vld [vmem:[%s776 + $0x1] sm:$0xff]
        %v1212 = vld [vmem:[%s776 + $0x9] sm:$0xff]
        %v1213 = vld [vmem:[%s776 + $0x19] sm:$0xff]
        %v1214 = vld [vmem:[%s776 + $0x21] sm:$0xff]
        %v1215 = vld [vmem:[%s776 + $0x31] sm:$0xff]
        %v1216 = vld [vmem:[%s776 + $0x39] sm:$0xff]
        %v1217 = vld [vmem:[%s776 + $0x49] sm:$0xff]
        %v1218 = vld [vmem:[%s776 + $0x51] sm:$0xff]
        %v1219 = vld [vmem:[%s776 + $0x61] sm:$0xff]
        %v1220 = vld [vmem:[%s776 + $0x69] sm:$0xff]
        %v1221 = vld [vmem:[%s776 + $0x79] sm:$0xff]
        %v1222 = vld [vmem:[%s776 + $0x81] sm:$0xff]
        %v1223 = vld [vmem:[%s776 + $0x91] sm:$0xff]
        %v1224 = vld [vmem:[%s776 + $0x99] sm:$0xff]
        %v1225 = vld [vmem:[%s776 + $0xa9] sm:$0xff]
        %v1226 = vld [vmem:[%s776 + $0xb1] sm:$0xff]
        %v1227 = vld [vmem:[%s776 + $0xc1] sm:$0xff]
        %v1228 = vld [vmem:[%s776 + $0xc9] sm:$0xff]
        %v1229 = vld [vmem:[%s776 + $0xd9] sm:$0xff]
        %v1230 = vld [vmem:[%s776 + $0xe1] sm:$0xff]
        %v1231 = vld [vmem:[%s776 + $0xf1] sm:$0xff]
        %v1232 = vld [vmem:[%s776 + $0xf9] sm:$0xff]
        %v1233 = vld [vmem:[%s776 + $0x109] sm:$0xff]
        %v1234 = vld [vmem:[%s776 + $0x111] sm:$0xff]
        %v1235 = vld [vmem:[%s776 + $0x121] sm:$0xff]
        %v1236 = vld [vmem:[%s776 + $0x129] sm:$0xff]
        %v1237 = vld [vmem:[%s776 + $0x139] sm:$0xff]
        %v1238 = vld [vmem:[%s776 + $0x141] sm:$0xff]
        %v1239 = vld [vmem:[%s776 + $0x151] sm:$0xff]
        %v1240 = vld [vmem:[%s776 + $0x159] sm:$0xff]
        %v1241 = vld [vmem:[%s776 + $0x169] sm:$0xff]
        %v1242 = vld [vmem:[%s776 + $0x171] sm:$0xff]
        %v1243 = vlaneseq
        %v1244 = vshrl.u32 %v1243, 7
        %v1245 = vsub.s32 4, %v1244
        %v1246 = vrot.slane %v809, %v1245
        %v1247 = vmul.f32 %v1211, %v1246
        %v1248 = vmul.f32 %v1212, %v1246
        %v1249 = vmul.f32 %v1213, %v1246
        %v1250 = vmul.f32 %v1214, %v1246
        %v1251 = vmul.f32 %v1215, %v1246
        %v1252 = vmul.f32 %v1216, %v1246
        %v1253 = vmul.f32 %v1217, %v1246
        %v1254 = vmul.f32 %v1218, %v1246
        %v1255 = vmul.f32 %v1219, %v1246
        %v1256 = vmul.f32 %v1220, %v1246
        %v1257 = vmul.f32 %v1221, %v1246
        %v1258 = vmul.f32 %v1222, %v1246
        %v1259 = vmul.f32 %v1223, %v1246
        %v1260 = vmul.f32 %v1224, %v1246
        %v1261 = vmul.f32 %v1225, %v1246
        %v1262 = vmul.f32 %v1226, %v1246
        %v1263 = vmul.f32 %v1227, %v1246
        %v1264 = vmul.f32 %v1228, %v1246
        %v1265 = vmul.f32 %v1229, %v1246
        %v1266 = vmul.f32 %v1230, %v1246
        %v1267 = vmul.f32 %v1231, %v1246
        %v1268 = vmul.f32 %v1232, %v1246
        %v1269 = vmul.f32 %v1233, %v1246
        %v1270 = vmul.f32 %v1234, %v1246
        %v1271 = vmul.f32 %v1235, %v1246
        %v1272 = vmul.f32 %v1236, %v1246
        %v1273 = vmul.f32 %v1237, %v1246
        %v1274 = vmul.f32 %v1238, %v1246
        %v1275 = vmul.f32 %v1239, %v1246
        %v1276 = vmul.f32 %v1240, %v1246
        %v1277 = vmul.f32 %v1241, %v1246
        %v1278 = vmul.f32 %v1242, %v1246
        %v1279 = vadd.f32 %v1179, %v1247
        %v1280 = vadd.f32 %v1180, %v1248
        %v1281 = vadd.f32 %v1181, %v1249
        %v1282 = vadd.f32 %v1182, %v1250
        %v1283 = vadd.f32 %v1183, %v1251
        %v1284 = vadd.f32 %v1184, %v1252
        %v1285 = vadd.f32 %v1185, %v1253
        %v1286 = vadd.f32 %v1186, %v1254
        %v1287 = vadd.f32 %v1187, %v1255
        %v1288 = vadd.f32 %v1188, %v1256
        %v1289 = vadd.f32 %v1189, %v1257
        %v1290 = vadd.f32 %v1190, %v1258
        %v1291 = vadd.f32 %v1191, %v1259
        %v1292 = vadd.f32 %v1192, %v1260
        %v1293 = vadd.f32 %v1193, %v1261
        %v1294 = vadd.f32 %v1194, %v1262
        %v1295 = vadd.f32 %v1195, %v1263
        %v1296 = vadd.f32 %v1196, %v1264
        %v1297 = vadd.f32 %v1197, %v1265
        %v1298 = vadd.f32 %v1198, %v1266
        %v1299 = vadd.f32 %v1199, %v1267
        %v1300 = vadd.f32 %v1200, %v1268
        %v1301 = vadd.f32 %v1201, %v1269
        %v1302 = vadd.f32 %v1202, %v1270
        %v1303 = vadd.f32 %v1203, %v1271
        %v1304 = vadd.f32 %v1204, %v1272
        %v1305 = vadd.f32 %v1205, %v1273
        %v1306 = vadd.f32 %v1206, %v1274
        %v1307 = vadd.f32 %v1207, %v1275
        %v1308 = vadd.f32 %v1208, %v1276
        %v1309 = vadd.f32 %v1209, %v1277
        %v1310 = vadd.f32 %v1210, %v1278
        %v1311 = vld [vmem:[%s776 + $0x2] sm:$0xff]
        %v1312 = vld [vmem:[%s776 + $0xa] sm:$0xff]
        %v1313 = vld [vmem:[%s776 + $0x1a] sm:$0xff]
        %v1314 = vld [vmem:[%s776 + $0x22] sm:$0xff]
        %v1315 = vld [vmem:[%s776 + $0x32] sm:$0xff]
        %v1316 = vld [vmem:[%s776 + $0x3a] sm:$0xff]
        %v1317 = vld [vmem:[%s776 + $0x4a] sm:$0xff]
        %v1318 = vld [vmem:[%s776 + $0x52] sm:$0xff]
        %v1319 = vld [vmem:[%s776 + $0x62] sm:$0xff]
        %v1320 = vld [vmem:[%s776 + $0x6a] sm:$0xff]
        %v1321 = vld [vmem:[%s776 + $0x7a] sm:$0xff]
        %v1322 = vld [vmem:[%s776 + $0x82] sm:$0xff]
        %v1323 = vld [vmem:[%s776 + $0x92] sm:$0xff]
        %v1324 = vld [vmem:[%s776 + $0x9a] sm:$0xff]
        %v1325 = vld [vmem:[%s776 + $0xaa] sm:$0xff]
        %v1326 = vld [vmem:[%s776 + $0xb2] sm:$0xff]
        %v1327 = vld [vmem:[%s776 + $0xc2] sm:$0xff]
        %v1328 = vld [vmem:[%s776 + $0xca] sm:$0xff]
        %v1329 = vld [vmem:[%s776 + $0xda] sm:$0xff]
        %v1330 = vld [vmem:[%s776 + $0xe2] sm:$0xff]
        %v1331 = vld [vmem:[%s776 + $0xf2] sm:$0xff]
        %v1332 = vld [vmem:[%s776 + $0xfa] sm:$0xff]
        %v1333 = vld [vmem:[%s776 + $0x10a] sm:$0xff]
        %v1334 = vld [vmem:[%s776 + $0x112] sm:$0xff]
        %v1335 = vld [vmem:[%s776 + $0x122] sm:$0xff]
        %v1336 = vld [vmem:[%s776 + $0x12a] sm:$0xff]
        %v1337 = vld [vmem:[%s776 + $0x13a] sm:$0xff]
        %v1338 = vld [vmem:[%s776 + $0x142] sm:$0xff]
        %v1339 = vld [vmem:[%s776 + $0x152] sm:$0xff]
        %v1340 = vld [vmem:[%s776 + $0x15a] sm:$0xff]
        %v1341 = vld [vmem:[%s776 + $0x16a] sm:$0xff]
        %v1342 = vld [vmem:[%s776 + $0x172] sm:$0xff]
        %v1343 = vlaneseq
        %v1344 = vshrl.u32 %v1343, 7
        %v1345 = vsub.s32 5, %v1344
        %v1346 = vrot.slane %v809, %v1345
        %v1347 = vmul.f32 %v1311, %v1346
        %v1348 = vmul.f32 %v1312, %v1346
        %v1349 = vmul.f32 %v1313, %v1346
        %v1350 = vmul.f32 %v1314, %v1346
        %v1351 = vmul.f32 %v1315, %v1346
        %v1352 = vmul.f32 %v1316, %v1346
        %v1353 = vmul.f32 %v1317, %v1346
        %v1354 = vmul.f32 %v1318, %v1346
        %v1355 = vmul.f32 %v1319, %v1346
        %v1356 = vmul.f32 %v1320, %v1346
        %v1357 = vmul.f32 %v1321, %v1346
        %v1358 = vmul.f32 %v1322, %v1346
        %v1359 = vmul.f32 %v1323, %v1346
        %v1360 = vmul.f32 %v1324, %v1346
        %v1361 = vmul.f32 %v1325, %v1346
        %v1362 = vmul.f32 %v1326, %v1346
        %v1363 = vmul.f32 %v1327, %v1346
        %v1364 = vmul.f32 %v1328, %v1346
        %v1365 = vmul.f32 %v1329, %v1346
        %v1366 = vmul.f32 %v1330, %v1346
        %v1367 = vmul.f32 %v1331, %v1346
        %v1368 = vmul.f32 %v1332, %v1346
        %v1369 = vmul.f32 %v1333, %v1346
        %v1370 = vmul.f32 %v1334, %v1346
        %v1371 = vmul.f32 %v1335, %v1346
        %v1372 = vmul.f32 %v1336, %v1346
        %v1373 = vmul.f32 %v1337, %v1346
        %v1374 = vmul.f32 %v1338, %v1346
        %v1375 = vmul.f32 %v1339, %v1346
        %v1376 = vmul.f32 %v1340, %v1346
        %v1377 = vmul.f32 %v1341, %v1346
        %v1378 = vmul.f32 %v1342, %v1346
        %v1379 = vadd.f32 %v1279, %v1347
        %v1380 = vadd.f32 %v1280, %v1348
        %v1381 = vadd.f32 %v1281, %v1349
        %v1382 = vadd.f32 %v1282, %v1350
        %v1383 = vadd.f32 %v1283, %v1351
        %v1384 = vadd.f32 %v1284, %v1352
        %v1385 = vadd.f32 %v1285, %v1353
        %v1386 = vadd.f32 %v1286, %v1354
        %v1387 = vadd.f32 %v1287, %v1355
        %v1388 = vadd.f32 %v1288, %v1356
        %v1389 = vadd.f32 %v1289, %v1357
        %v1390 = vadd.f32 %v1290, %v1358
        %v1391 = vadd.f32 %v1291, %v1359
        %v1392 = vadd.f32 %v1292, %v1360
        %v1393 = vadd.f32 %v1293, %v1361
        %v1394 = vadd.f32 %v1294, %v1362
        %v1395 = vadd.f32 %v1295, %v1363
        %v1396 = vadd.f32 %v1296, %v1364
        %v1397 = vadd.f32 %v1297, %v1365
        %v1398 = vadd.f32 %v1298, %v1366
        %v1399 = vadd.f32 %v1299, %v1367
        %v1400 = vadd.f32 %v1300, %v1368
        %v1401 = vadd.f32 %v1301, %v1369
        %v1402 = vadd.f32 %v1302, %v1370
        %v1403 = vadd.f32 %v1303, %v1371
        %v1404 = vadd.f32 %v1304, %v1372
        %v1405 = vadd.f32 %v1305, %v1373
        %v1406 = vadd.f32 %v1306, %v1374
        %v1407 = vadd.f32 %v1307, %v1375
        %v1408 = vadd.f32 %v1308, %v1376
        %v1409 = vadd.f32 %v1309, %v1377
        %v1410 = vadd.f32 %v1310, %v1378
        %s1411 = scalar_lea.vmem [#allocation2], 48
        %v1412 = vld [vmem:[%s1411] sm:$0xff]
        %v1413 = vld [vmem:[%s1411 + $0x8] sm:$0xff]
        %v1414 = vld [vmem:[%s1411 + $0x18] sm:$0xff]
        %v1415 = vld [vmem:[%s1411 + $0x20] sm:$0xff]
        %v1416 = vld [vmem:[%s1411 + $0x30] sm:$0xff]
        %v1417 = vld [vmem:[%s1411 + $0x38] sm:$0xff]
        %v1418 = vld [vmem:[%s1411 + $0x48] sm:$0xff]
        %v1419 = vld [vmem:[%s1411 + $0x50] sm:$0xff]
        %v1420 = vld [vmem:[%s1411 + $0x60] sm:$0xff]
        %v1421 = vld [vmem:[%s1411 + $0x68] sm:$0xff]
        %v1422 = vld [vmem:[%s1411 + $0x78] sm:$0xff]
        %v1423 = vld [vmem:[%s1411 + $0x80] sm:$0xff]
        %v1424 = vld [vmem:[%s1411 + $0x90] sm:$0xff]
        %v1425 = vld [vmem:[%s1411 + $0x98] sm:$0xff]
        %v1426 = vld [vmem:[%s1411 + $0xa8] sm:$0xff]
        %v1427 = vld [vmem:[%s1411 + $0xb0] sm:$0xff]
        %v1428 = vld [vmem:[%s1411 + $0xc0] sm:$0xff]
        %v1429 = vld [vmem:[%s1411 + $0xc8] sm:$0xff]
        %v1430 = vld [vmem:[%s1411 + $0xd8] sm:$0xff]
        %v1431 = vld [vmem:[%s1411 + $0xe0] sm:$0xff]
        %v1432 = vld [vmem:[%s1411 + $0xf0] sm:$0xff]
        %v1433 = vld [vmem:[%s1411 + $0xf8] sm:$0xff]
        %v1434 = vld [vmem:[%s1411 + $0x108] sm:$0xff]
        %v1435 = vld [vmem:[%s1411 + $0x110] sm:$0xff]
        %v1436 = vld [vmem:[%s1411 + $0x120] sm:$0xff]
        %v1437 = vld [vmem:[%s1411 + $0x128] sm:$0xff]
        %v1438 = vld [vmem:[%s1411 + $0x138] sm:$0xff]
        %v1439 = vld [vmem:[%s1411 + $0x140] sm:$0xff]
        %v1440 = vld [vmem:[%s1411 + $0x150] sm:$0xff]
        %v1441 = vld [vmem:[%s1411 + $0x158] sm:$0xff]
        %v1442 = vld [vmem:[%s1411 + $0x168] sm:$0xff]
        %v1443 = vld [vmem:[%s1411 + $0x170] sm:$0xff]
        %v1444 = vlaneseq
        %v1445 = vshrl.u32 %v1444, 7
        %v1446 = vsub.s32 6, %v1445
        %v1447 = vrot.slane %v809, %v1446
        %v1448 = vmul.f32 %v1412, %v1447
        %v1449 = vmul.f32 %v1413, %v1447
        %v1450 = vmul.f32 %v1414, %v1447
        %v1451 = vmul.f32 %v1415, %v1447
        %v1452 = vmul.f32 %v1416, %v1447
        %v1453 = vmul.f32 %v1417, %v1447
        %v1454 = vmul.f32 %v1418, %v1447
        %v1455 = vmul.f32 %v1419, %v1447
        %v1456 = vmul.f32 %v1420, %v1447
        %v1457 = vmul.f32 %v1421, %v1447
        %v1458 = vmul.f32 %v1422, %v1447
        %v1459 = vmul.f32 %v1423, %v1447
        %v1460 = vmul.f32 %v1424, %v1447
        %v1461 = vmul.f32 %v1425, %v1447
        %v1462 = vmul.f32 %v1426, %v1447
        %v1463 = vmul.f32 %v1427, %v1447
        %v1464 = vmul.f32 %v1428, %v1447
        %v1465 = vmul.f32 %v1429, %v1447
        %v1466 = vmul.f32 %v1430, %v1447
        %v1467 = vmul.f32 %v1431, %v1447
        %v1468 = vmul.f32 %v1432, %v1447
        %v1469 = vmul.f32 %v1433, %v1447
        %v1470 = vmul.f32 %v1434, %v1447
        %v1471 = vmul.f32 %v1435, %v1447
        %v1472 = vmul.f32 %v1436, %v1447
        %v1473 = vmul.f32 %v1437, %v1447
        %v1474 = vmul.f32 %v1438, %v1447
        %v1475 = vmul.f32 %v1439, %v1447
        %v1476 = vmul.f32 %v1440, %v1447
        %v1477 = vmul.f32 %v1441, %v1447
        %v1478 = vmul.f32 %v1442, %v1447
        %v1479 = vmul.f32 %v1443, %v1447
        %v1480 = vadd.f32 %v1379, %v1448
        %v1481 = vadd.f32 %v1380, %v1449
        %v1482 = vadd.f32 %v1381, %v1450
        %v1483 = vadd.f32 %v1382, %v1451
        %v1484 = vadd.f32 %v1383, %v1452
        %v1485 = vadd.f32 %v1384, %v1453
        %v1486 = vadd.f32 %v1385, %v1454
        %v1487 = vadd.f32 %v1386, %v1455
        %v1488 = vadd.f32 %v1387, %v1456
        %v1489 = vadd.f32 %v1388, %v1457
        %v1490 = vadd.f32 %v1389, %v1458
        %v1491 = vadd.f32 %v1390, %v1459
        %v1492 = vadd.f32 %v1391, %v1460
        %v1493 = vadd.f32 %v1392, %v1461
        %v1494 = vadd.f32 %v1393, %v1462
        %v1495 = vadd.f32 %v1394, %v1463
        %v1496 = vadd.f32 %v1395, %v1464
        %v1497 = vadd.f32 %v1396, %v1465
        %v1498 = vadd.f32 %v1397, %v1466
        %v1499 = vadd.f32 %v1398, %v1467
        %v1500 = vadd.f32 %v1399, %v1468
        %v1501 = vadd.f32 %v1400, %v1469
        %v1502 = vadd.f32 %v1401, %v1470
        %v1503 = vadd.f32 %v1402, %v1471
        %v1504 = vadd.f32 %v1403, %v1472
        %v1505 = vadd.f32 %v1404, %v1473
        %v1506 = vadd.f32 %v1405, %v1474
        %v1507 = vadd.f32 %v1406, %v1475
        %v1508 = vadd.f32 %v1407, %v1476
        %v1509 = vadd.f32 %v1408, %v1477
        %v1510 = vadd.f32 %v1409, %v1478
        %v1511 = vadd.f32 %v1410, %v1479
        %v1512 = vld [vmem:[%s1411 + $0x1] sm:$0xff]
        %v1513 = vld [vmem:[%s1411 + $0x9] sm:$0xff]
        %v1514 = vld [vmem:[%s1411 + $0x19] sm:$0xff]
        %v1515 = vld [vmem:[%s1411 + $0x21] sm:$0xff]
        %v1516 = vld [vmem:[%s1411 + $0x31] sm:$0xff]
        %v1517 = vld [vmem:[%s1411 + $0x39] sm:$0xff]
        %v1518 = vld [vmem:[%s1411 + $0x49] sm:$0xff]
        %v1519 = vld [vmem:[%s1411 + $0x51] sm:$0xff]
        %v1520 = vld [vmem:[%s1411 + $0x61] sm:$0xff]
        %v1521 = vld [vmem:[%s1411 + $0x69] sm:$0xff]
        %v1522 = vld [vmem:[%s1411 + $0x79] sm:$0xff]
        %v1523 = vld [vmem:[%s1411 + $0x81] sm:$0xff]
        %v1524 = vld [vmem:[%s1411 + $0x91] sm:$0xff]
        %v1525 = vld [vmem:[%s1411 + $0x99] sm:$0xff]
        %v1526 = vld [vmem:[%s1411 + $0xa9] sm:$0xff]
        %v1527 = vld [vmem:[%s1411 + $0xb1] sm:$0xff]
        %v1528 = vld [vmem:[%s1411 + $0xc1] sm:$0xff]
        %v1529 = vld [vmem:[%s1411 + $0xc9] sm:$0xff]
        %v1530 = vld [vmem:[%s1411 + $0xd9] sm:$0xff]
        %v1531 = vld [vmem:[%s1411 + $0xe1] sm:$0xff]
        %v1532 = vld [vmem:[%s1411 + $0xf1] sm:$0xff]
        %v1533 = vld [vmem:[%s1411 + $0xf9] sm:$0xff]
        %v1534 = vld [vmem:[%s1411 + $0x109] sm:$0xff]
        %v1535 = vld [vmem:[%s1411 + $0x111] sm:$0xff]
        %v1536 = vld [vmem:[%s1411 + $0x121] sm:$0xff]
        %v1537 = vld [vmem:[%s1411 + $0x129] sm:$0xff]
        %v1538 = vld [vmem:[%s1411 + $0x139] sm:$0xff]
        %v1539 = vld [vmem:[%s1411 + $0x141] sm:$0xff]
        %v1540 = vld [vmem:[%s1411 + $0x151] sm:$0xff]
        %v1541 = vld [vmem:[%s1411 + $0x159] sm:$0xff]
        %v1542 = vld [vmem:[%s1411 + $0x169] sm:$0xff]
        %v1543 = vld [vmem:[%s1411 + $0x171] sm:$0xff]
        %v1544 = vlaneseq
        %v1545 = vshrl.u32 %v1544, 7
        %v1546 = vsub.s32 7, %v1545
        %v1547 = vrot.slane %v809, %v1546
        %v1548 = vmul.f32 %v1512, %v1547
        %v1549 = vmul.f32 %v1513, %v1547
        %v1550 = vmul.f32 %v1514, %v1547
        %v1551 = vmul.f32 %v1515, %v1547
        %v1552 = vmul.f32 %v1516, %v1547
        %v1553 = vmul.f32 %v1517, %v1547
        %v1554 = vmul.f32 %v1518, %v1547
        %v1555 = vmul.f32 %v1519, %v1547
        %v1556 = vmul.f32 %v1520, %v1547
        %v1557 = vmul.f32 %v1521, %v1547
        %v1558 = vmul.f32 %v1522, %v1547
        %v1559 = vmul.f32 %v1523, %v1547
        %v1560 = vmul.f32 %v1524, %v1547
        %v1561 = vmul.f32 %v1525, %v1547
        %v1562 = vmul.f32 %v1526, %v1547
        %v1563 = vmul.f32 %v1527, %v1547
        %v1564 = vmul.f32 %v1528, %v1547
        %v1565 = vmul.f32 %v1529, %v1547
        %v1566 = vmul.f32 %v1530, %v1547
        %v1567 = vmul.f32 %v1531, %v1547
        %v1568 = vmul.f32 %v1532, %v1547
        %v1569 = vmul.f32 %v1533, %v1547
        %v1570 = vmul.f32 %v1534, %v1547
        %v1571 = vmul.f32 %v1535, %v1547
        %v1572 = vmul.f32 %v1536, %v1547
        %v1573 = vmul.f32 %v1537, %v1547
        %v1574 = vmul.f32 %v1538, %v1547
        %v1575 = vmul.f32 %v1539, %v1547
        %v1576 = vmul.f32 %v1540, %v1547
        %v1577 = vmul.f32 %v1541, %v1547
        %v1578 = vmul.f32 %v1542, %v1547
        %v1579 = vmul.f32 %v1543, %v1547
        %v1580 = vadd.f32 %v1480, %v1548
        %v1581 = vadd.f32 %v1481, %v1549
        %v1582 = vadd.f32 %v1482, %v1550
        %v1583 = vadd.f32 %v1483, %v1551
        %v1584 = vadd.f32 %v1484, %v1552
        %v1585 = vadd.f32 %v1485, %v1553
        %v1586 = vadd.f32 %v1486, %v1554
        %v1587 = vadd.f32 %v1487, %v1555
        %v1588 = vadd.f32 %v1488, %v1556
        %v1589 = vadd.f32 %v1489, %v1557
        %v1590 = vadd.f32 %v1490, %v1558
        %v1591 = vadd.f32 %v1491, %v1559
        %v1592 = vadd.f32 %v1492, %v1560
        %v1593 = vadd.f32 %v1493, %v1561
        %v1594 = vadd.f32 %v1494, %v1562
        %v1595 = vadd.f32 %v1495, %v1563
        %v1596 = vadd.f32 %v1496, %v1564
        %v1597 = vadd.f32 %v1497, %v1565
        %v1598 = vadd.f32 %v1498, %v1566
        %v1599 = vadd.f32 %v1499, %v1567
        %v1600 = vadd.f32 %v1500, %v1568
        %v1601 = vadd.f32 %v1501, %v1569
        %v1602 = vadd.f32 %v1502, %v1570
        %v1603 = vadd.f32 %v1503, %v1571
        %v1604 = vadd.f32 %v1504, %v1572
        %v1605 = vadd.f32 %v1505, %v1573
        %v1606 = vadd.f32 %v1506, %v1574
        %v1607 = vadd.f32 %v1507, %v1575
        %v1608 = vadd.f32 %v1508, %v1576
        %v1609 = vadd.f32 %v1509, %v1577
        %v1610 = vadd.f32 %v1510, %v1578
        %v1611 = vadd.f32 %v1511, %v1579
        %v1612 = vld [vmem:[%s1411 + $0x2] sm:$0xff]
        %v1613 = vld [vmem:[%s1411 + $0xa] sm:$0xff]
        %v1614 = vld [vmem:[%s1411 + $0x1a] sm:$0xff]
        %v1615 = vld [vmem:[%s1411 + $0x22] sm:$0xff]
        %v1616 = vld [vmem:[%s1411 + $0x32] sm:$0xff]
        %v1617 = vld [vmem:[%s1411 + $0x3a] sm:$0xff]
        %v1618 = vld [vmem:[%s1411 + $0x4a] sm:$0xff]
        %v1619 = vld [vmem:[%s1411 + $0x52] sm:$0xff]
        %v1620 = vld [vmem:[%s1411 + $0x62] sm:$0xff]
        %v1621 = vld [vmem:[%s1411 + $0x6a] sm:$0xff]
        %v1622 = vld [vmem:[%s1411 + $0x7a] sm:$0xff]
        %v1623 = vld [vmem:[%s1411 + $0x82] sm:$0xff]
        %v1624 = vld [vmem:[%s1411 + $0x92] sm:$0xff]
        %v1625 = vld [vmem:[%s1411 + $0x9a] sm:$0xff]
        %v1626 = vld [vmem:[%s1411 + $0xaa] sm:$0xff]
        %v1627 = vld [vmem:[%s1411 + $0xb2] sm:$0xff]
        %v1628 = vld [vmem:[%s1411 + $0xc2] sm:$0xff]
        %v1629 = vld [vmem:[%s1411 + $0xca] sm:$0xff]
        %v1630 = vld [vmem:[%s1411 + $0xda] sm:$0xff]
        %v1631 = vld [vmem:[%s1411 + $0xe2] sm:$0xff]
        %v1632 = vld [vmem:[%s1411 + $0xf2] sm:$0xff]
        %v1633 = vld [vmem:[%s1411 + $0xfa] sm:$0xff]
        %v1634 = vld [vmem:[%s1411 + $0x10a] sm:$0xff]
        %v1635 = vld [vmem:[%s1411 + $0x112] sm:$0xff]
        %v1636 = vld [vmem:[%s1411 + $0x122] sm:$0xff]
        %v1637 = vld [vmem:[%s1411 + $0x12a] sm:$0xff]
        %v1638 = vld [vmem:[%s1411 + $0x13a] sm:$0xff]
        %v1639 = vld [vmem:[%s1411 + $0x142] sm:$0xff]
        %v1640 = vld [vmem:[%s1411 + $0x152] sm:$0xff]
        %v1641 = vld [vmem:[%s1411 + $0x15a] sm:$0xff]
        %v1642 = vld [vmem:[%s1411 + $0x16a] sm:$0xff]
        %v1643 = vld [vmem:[%s1411 + $0x172] sm:$0xff]
        %v1644 = vlaneseq
        %v1645 = vshrl.u32 %v1644, 7
        %v1646 = vsub.s32 0, %v1645
        %v1647 = vrot.slane %v810, %v1646
        %v1648 = vmul.f32 %v1612, %v1647
        %v1649 = vmul.f32 %v1613, %v1647
        %v1650 = vmul.f32 %v1614, %v1647
        %v1651 = vmul.f32 %v1615, %v1647
        %v1652 = vmul.f32 %v1616, %v1647
        %v1653 = vmul.f32 %v1617, %v1647
        %v1654 = vmul.f32 %v1618, %v1647
        %v1655 = vmul.f32 %v1619, %v1647
        %v1656 = vmul.f32 %v1620, %v1647
        %v1657 = vmul.f32 %v1621, %v1647
        %v1658 = vmul.f32 %v1622, %v1647
        %v1659 = vmul.f32 %v1623, %v1647
        %v1660 = vmul.f32 %v1624, %v1647
        %v1661 = vmul.f32 %v1625, %v1647
        %v1662 = vmul.f32 %v1626, %v1647
        %v1663 = vmul.f32 %v1627, %v1647
        %v1664 = vmul.f32 %v1628, %v1647
        %v1665 = vmul.f32 %v1629, %v1647
        %v1666 = vmul.f32 %v1630, %v1647
        %v1667 = vmul.f32 %v1631, %v1647
        %v1668 = vmul.f32 %v1632, %v1647
        %v1669 = vmul.f32 %v1633, %v1647
        %v1670 = vmul.f32 %v1634, %v1647
        %v1671 = vmul.f32 %v1635, %v1647
        %v1672 = vmul.f32 %v1636, %v1647
        %v1673 = vmul.f32 %v1637, %v1647
        %v1674 = vmul.f32 %v1638, %v1647
        %v1675 = vmul.f32 %v1639, %v1647
        %v1676 = vmul.f32 %v1640, %v1647
        %v1677 = vmul.f32 %v1641, %v1647
        %v1678 = vmul.f32 %v1642, %v1647
        %v1679 = vmul.f32 %v1643, %v1647
        %v1680 = vadd.f32 %v1580, %v1648
        %v1681 = vadd.f32 %v1581, %v1649
        %v1682 = vadd.f32 %v1582, %v1650
        %v1683 = vadd.f32 %v1583, %v1651
        %v1684 = vadd.f32 %v1584, %v1652
        %v1685 = vadd.f32 %v1585, %v1653
        %v1686 = vadd.f32 %v1586, %v1654
        %v1687 = vadd.f32 %v1587, %v1655
        %v1688 = vadd.f32 %v1588, %v1656
        %v1689 = vadd.f32 %v1589, %v1657
        %v1690 = vadd.f32 %v1590, %v1658
        %v1691 = vadd.f32 %v1591, %v1659
        %v1692 = vadd.f32 %v1592, %v1660
        %v1693 = vadd.f32 %v1593, %v1661
        %v1694 = vadd.f32 %v1594, %v1662
        %v1695 = vadd.f32 %v1595, %v1663
        %v1696 = vadd.f32 %v1596, %v1664
        %v1697 = vadd.f32 %v1597, %v1665
        %v1698 = vadd.f32 %v1598, %v1666
        %v1699 = vadd.f32 %v1599, %v1667
        %v1700 = vadd.f32 %v1600, %v1668
        %v1701 = vadd.f32 %v1601, %v1669
        %v1702 = vadd.f32 %v1602, %v1670
        %v1703 = vadd.f32 %v1603, %v1671
        %v1704 = vadd.f32 %v1604, %v1672
        %v1705 = vadd.f32 %v1605, %v1673
        %v1706 = vadd.f32 %v1606, %v1674
        %v1707 = vadd.f32 %v1607, %v1675
        %v1708 = vadd.f32 %v1608, %v1676
        %v1709 = vadd.f32 %v1609, %v1677
        %v1710 = vadd.f32 %v1610, %v1678
        %v1711 = vadd.f32 %v1611, %v1679
        %v1712 = vld [vmem:[%s4] sm:$0x1]
        %v1714 = vlaneseq
        %v1715 = vshrl.u32 %v1714, 7
        %v1716 = vsub.s32 0, %v1715
        %v1717 = vrot.slane %v1712, %v1716
        %v1719 = vadd.f32 %v1680, %v1717
        %v1720 = vadd.f32 %v1681, %v1717
        %v1721 = vadd.f32 %v1682, %v1717
        %v1722 = vadd.f32 %v1683, %v1717
        %v1723 = vadd.f32 %v1684, %v1717
        %v1724 = vadd.f32 %v1685, %v1717
        %v1725 = vadd.f32 %v1686, %v1717
        %v1726 = vadd.f32 %v1687, %v1717
        %v1727 = vadd.f32 %v1688, %v1717
        %v1728 = vadd.f32 %v1689, %v1717
        %v1729 = vadd.f32 %v1690, %v1717
        %v1730 = vadd.f32 %v1691, %v1717
        %v1731 = vadd.f32 %v1692, %v1717
        %v1732 = vadd.f32 %v1693, %v1717
        %v1733 = vadd.f32 %v1694, %v1717
        %v1734 = vadd.f32 %v1695, %v1717
        %v1735 = vadd.f32 %v1696, %v1717
        %v1736 = vadd.f32 %v1697, %v1717
        %v1737 = vadd.f32 %v1698, %v1717
        %v1738 = vadd.f32 %v1699, %v1717
        %v1739 = vadd.f32 %v1700, %v1717
        %v1740 = vadd.f32 %v1701, %v1717
        %v1741 = vadd.f32 %v1702, %v1717
        %v1742 = vadd.f32 %v1703, %v1717
        %v1743 = vadd.f32 %v1704, %v1717
        %v1744 = vadd.f32 %v1705, %v1717
        %v1745 = vadd.f32 %v1706, %v1717
        %v1746 = vadd.f32 %v1707, %v1717
        %v1747 = vadd.f32 %v1708, %v1717
        %v1748 = vadd.f32 %v1709, %v1717
        %v1749 = vadd.f32 %v1710, %v1717
        %v1750 = vadd.f32 %v1711, %v1717
        %v1751 = vmax.f32 %v1719, 0.0
        %v1752 = vmax.f32 %v1720, 0.0
        %v1753 = vmax.f32 %v1721, 0.0
        %v1754 = vmax.f32 %v1722, 0.0
        %v1755 = vmax.f32 %v1723, 0.0
        %v1756 = vmax.f32 %v1724, 0.0
        %v1757 = vmax.f32 %v1725, 0.0
        %v1758 = vmax.f32 %v1726, 0.0
        %v1759 = vmax.f32 %v1727, 0.0
        %v1760 = vmax.f32 %v1728, 0.0
        %v1761 = vmax.f32 %v1729, 0.0
        %v1762 = vmax.f32 %v1730, 0.0
        %v1763 = vmax.f32 %v1731, 0.0
        %v1764 = vmax.f32 %v1732, 0.0
        %v1765 = vmax.f32 %v1733, 0.0
        %v1766 = vmax.f32 %v1734, 0.0
        %v1767 = vmax.f32 %v1735, 0.0
        %v1768 = vmax.f32 %v1736, 0.0
        %v1769 = vmax.f32 %v1737, 0.0
        %v1770 = vmax.f32 %v1738, 0.0
        %v1771 = vmax.f32 %v1739, 0.0
        %v1772 = vmax.f32 %v1740, 0.0
        %v1773 = vmax.f32 %v1741, 0.0
        %v1774 = vmax.f32 %v1742, 0.0
        %v1775 = vmax.f32 %v1743, 0.0
        %v1776 = vmax.f32 %v1744, 0.0
        %v1777 = vmax.f32 %v1745, 0.0
        %v1778 = vmax.f32 %v1746, 0.0
        %v1779 = vmax.f32 %v1747, 0.0
        %v1780 = vmax.f32 %v1748, 0.0
        %v1781 = vmax.f32 %v1749, 0.0
        %v1782 = vmax.f32 %v1750, 0.0
        %v1783 = vpack.c.bf16 %v1752, %v1751
        %v1784 = vpack.c.bf16 %v1754, %v1753
        %v1785 = vpack.c.bf16 %v1756, %v1755
        %v1786 = vpack.c.bf16 %v1758, %v1757
        %v1787 = vpack.c.bf16 %v1760, %v1759
        %v1788 = vpack.c.bf16 %v1762, %v1761
        %v1789 = vpack.c.bf16 %v1764, %v1763
        %v1790 = vpack.c.bf16 %v1766, %v1765
        %v1791 = vpack.c.bf16 %v1768, %v1767
        %v1792 = vpack.c.bf16 %v1770, %v1769
        %v1793 = vpack.c.bf16 %v1772, %v1771
        %v1794 = vpack.c.bf16 %v1774, %v1773
        %v1795 = vpack.c.bf16 %v1776, %v1775
        %v1796 = vpack.c.bf16 %v1778, %v1777
        %v1797 = vpack.c.bf16 %v1780, %v1779
        %v1798 = vpack.c.bf16 %v1782, %v1781
        %v1799 = vld [vmem:[#allocation9] sm:$0xf]
        %v1800 = vld [vmem:[#allocation9 + $0x4] sm:$0xf]
        %v1801 = vld [vmem:[#allocation9 + $0x8] sm:$0xf]
        %v1802 = vld [vmem:[#allocation9 + $0xc] sm:$0xf]
        %v1803 = vld [vmem:[#allocation9 + $0x10] sm:$0xf]
        %v1804 = vld [vmem:[#allocation9 + $0x14] sm:$0xf]
        %v1805 = vld [vmem:[#allocation9 + $0x18] sm:$0xf]
        %v1806 = vld [vmem:[#allocation9 + $0x1c] sm:$0xf]
        %v1807 = vld [vmem:[#allocation9 + $0x20] sm:$0xf]
        %v1808 = vld [vmem:[#allocation9 + $0x24] sm:$0xf]
        %v1809 = vld [vmem:[#allocation9 + $0x28] sm:$0xf]
        %v1810 = vld [vmem:[#allocation9 + $0x2c] sm:$0xf]
        %v1811 = vld [vmem:[#allocation9 + $0x30] sm:$0xf]
        %v1812 = vld [vmem:[#allocation9 + $0x34] sm:$0xf]
        %v1813 = vld [vmem:[#allocation9 + $0x38] sm:$0xf]
        %v1814 = vld [vmem:[#allocation9 + $0x3c] sm:$0xf]
        %v1815 = vld [vmem:[%s6] sm:$0x1]
        %v1817 = vlaneseq
        %v1818 = vshrl.u32 %v1817, 7
        %v1819 = vsub.s32 0, %v1818
        %v1820 = vrot.slane %v1815, %v1819
        %v1838 = vunpack.c.l.b16 %v1799
        %v1839 = vunpack.c.l.b16 %v1800
        %v1840 = vunpack.c.l.b16 %v1801
        %v1841 = vunpack.c.l.b16 %v1802
        %v1842 = vunpack.c.l.b16 %v1803
        %v1843 = vunpack.c.l.b16 %v1804
        %v1844 = vunpack.c.l.b16 %v1805
        %v1845 = vunpack.c.l.b16 %v1806
        %v1846 = vunpack.c.l.b16 %v1807
        %v1847 = vunpack.c.l.b16 %v1808
        %v1848 = vunpack.c.l.b16 %v1809
        %v1849 = vunpack.c.l.b16 %v1810
        %v1850 = vunpack.c.l.b16 %v1811
        %v1851 = vunpack.c.l.b16 %v1812
        %v1852 = vunpack.c.l.b16 %v1813
        %v1853 = vunpack.c.l.b16 %v1814
        %v1854 = vpack.c.b16 %v1839, %v1838
        %v1855 = vpack.c.b16 %v1841, %v1840
        %v1856 = vpack.c.b16 %v1843, %v1842
        %v1857 = vpack.c.b16 %v1845, %v1844
        %v1858 = vpack.c.b16 %v1847, %v1846
        %v1859 = vpack.c.b16 %v1849, %v1848
        %v1860 = vpack.c.b16 %v1851, %v1850
        %v1861 = vpack.c.b16 %v1853, %v1852
        %1870 = vmatprep.subr.bf16.mxu0 0
        %1871 = vmatpush1.bf16.msra.mxu0 %v1854
        %1872 = vmatprep.subr.bf16.mxu0 0
        %1873 = vmatpush1.bf16.msra.mxu0 %v1855
        %1874 = vmatprep.subr.bf16.mxu0 0
        %1875 = vmatpush1.bf16.msra.mxu0 %v1856
        %1876 = vmatprep.subr.bf16.mxu0 0
        %1877 = vmatpush1.bf16.msra.mxu0 %v1857
        %1878 = vmatprep.subr.bf16.mxu0 0
        %1879 = vmatpush1.bf16.msra.mxu0 %v1858
        %1880 = vmatprep.subr.bf16.mxu0 0
        %1881 = vmatpush1.bf16.msra.mxu0 %v1859
        %1882 = vmatprep.subr.bf16.mxu0 0
        %1883 = vmatpush1.bf16.msra.mxu0 %v1860
        %1884 = vmatprep.subr.bf16.mxu0 0
        %1885 = vmatpush1.bf16.msra.mxu0 %v1861
        %1886 = vmatprep.subr.bf16.mxu0 0
        %1887 = vmatpush1.bf16.msra.mxu0 0
        %1888 = vmatprep.subr.bf16.mxu0 0
        %1889 = vmatpush1.bf16.msra.mxu0 0
        %1890 = vmatprep.subr.bf16.mxu0 0
        %1891 = vmatpush1.bf16.msra.mxu0 0
        %1892 = vmatprep.subr.bf16.mxu0 0
        %1893 = vmatpush1.bf16.msra.mxu0 0
        %1894 = vmatprep.subr.bf16.mxu0 0
        %1895 = vmatpush1.bf16.msra.mxu0 0
        %1896 = vmatprep.subr.bf16.mxu0 0
        %1897 = vmatpush1.bf16.msra.mxu0 0
        %1898 = vmatprep.subr.bf16.mxu0 0
        %1899 = vmatpush1.bf16.msra.mxu0 0
        %1900 = vmatprep.subr.bf16.mxu0 0
        %1901 = vmatpush1.bf16.msra.mxu0 0
        %1902 = vmatprep.mubr.bf16.mxu0 0
        %1903 = vmatmul.mubr.bf16.gmra.mrb[0].mxu0 %v1783
        %v1904 = vpop.f32.mrb[0].mxu0
        %v1905 = vadd.f32 %v1820, %v1904
        %v1906 = vpop.f32.mrb[0].mxu0
        %v1907 = vpop.f32.mrb[0].mxu0
        %v1908 = vadd.f32 %v1820, %v1907
        %v1909 = vpop.f32.mrb[0].mxu0
        %1910 = vmatprep.mubr.bf16.mxu0 0
        %1911 = vmatmul.mubr.bf16.gmra.mrb[0].mxu0 %v1784
        %v1912 = vpop.f32.mrb[0].mxu0
        %v1913 = vadd.f32 %v1820, %v1912
        %v1914 = vpop.f32.mrb[0].mxu0
        %v1915 = vpop.f32.mrb[0].mxu0
        %v1916 = vadd.f32 %v1820, %v1915
        %v1917 = vpop.f32.mrb[0].mxu0
        %1918 = vmatprep.mubr.bf16.mxu0 0
        %1919 = vmatmul.mubr.bf16.gmra.mrb[0].mxu0 %v1785
        %v1920 = vpop.f32.mrb[0].mxu0
        %v1921 = vadd.f32 %v1820, %v1920
        %v1922 = vpop.f32.mrb[0].mxu0
        %v1923 = vpop.f32.mrb[0].mxu0
        %v1924 = vadd.f32 %v1820, %v1923
        %v1925 = vpop.f32.mrb[0].mxu0
        %1926 = vmatprep.mubr.bf16.mxu0 0
        %1927 = vmatmul.mubr.bf16.gmra.mrb[0].mxu0 %v1786
        %v1928 = vpop.f32.mrb[0].mxu0
        %v1929 = vadd.f32 %v1820, %v1928
        %v1930 = vpop.f32.mrb[0].mxu0
        %v1931 = vpop.f32.mrb[0].mxu0
        %v1932 = vadd.f32 %v1820, %v1931
        %v1933 = vpop.f32.mrb[0].mxu0
        %1934 = vmatprep.mubr.bf16.mxu0 0
        %1935 = vmatmul.mubr.bf16.gmra.mrb[0].mxu0 %v1787
        %v1936 = vpop.f32.mrb[0].mxu0
        %v1937 = vadd.f32 %v1820, %v1936
        %v1938 = vpop.f32.mrb[0].mxu0
        %v1939 = vpop.f32.mrb[0].mxu0
        %v1940 = vadd.f32 %v1820, %v1939
        %v1941 = vpop.f32.mrb[0].mxu0
        %1942 = vmatprep.mubr.bf16.mxu0 0
        %1943 = vmatmul.mubr.bf16.gmra.mrb[0].mxu0 %v1788
        %v1944 = vpop.f32.mrb[0].mxu0
        %v1945 = vadd.f32 %v1820, %v1944
        %v1946 = vpop.f32.mrb[0].mxu0
        %v1947 = vpop.f32.mrb[0].mxu0
        %v1948 = vadd.f32 %v1820, %v1947
        %v1949 = vpop.f32.mrb[0].mxu0
        %1950 = vmatprep.mubr.bf16.mxu0 0
        %1951 = vmatmul.mubr.bf16.gmra.mrb[0].mxu0 %v1789
        %v1952 = vpop.f32.mrb[0].mxu0
        %v1953 = vadd.f32 %v1820, %v1952
        %v1954 = vpop.f32.mrb[0].mxu0
        %v1955 = vpop.f32.mrb[0].mxu0
        %v1956 = vadd.f32 %v1820, %v1955
        %v1957 = vpop.f32.mrb[0].mxu0
        %1958 = vmatprep.mubr.bf16.mxu0 0
        %1959 = vmatmul.mubr.bf16.gmra.mrb[0].mxu0 %v1790
        %v1960 = vpop.f32.mrb[0].mxu0
        %v1961 = vadd.f32 %v1820, %v1960
        %v1962 = vpop.f32.mrb[0].mxu0
        %v1963 = vpop.f32.mrb[0].mxu0
        %v1964 = vadd.f32 %v1820, %v1963
        %v1965 = vpop.f32.mrb[0].mxu0
        %1966 = vmatprep.mubr.bf16.mxu0 0
        %1967 = vmatmul.mubr.bf16.gmra.mrb[0].mxu0 %v1791
        %v1968 = vpop.f32.mrb[0].mxu0
        %v1969 = vadd.f32 %v1820, %v1968
        %v1970 = vpop.f32.mrb[0].mxu0
        %v1971 = vpop.f32.mrb[0].mxu0
        %v1972 = vadd.f32 %v1820, %v1971
        %v1973 = vpop.f32.mrb[0].mxu0
        %1974 = vmatprep.mubr.bf16.mxu0 0
        %1975 = vmatmul.mubr.bf16.gmra.mrb[0].mxu0 %v1792
        %v1976 = vpop.f32.mrb[0].mxu0
        %v1977 = vadd.f32 %v1820, %v1976
        %v1978 = vpop.f32.mrb[0].mxu0
        %v1979 = vpop.f32.mrb[0].mxu0
        %v1980 = vadd.f32 %v1820, %v1979
        %v1981 = vpop.f32.mrb[0].mxu0
        %1982 = vmatprep.mubr.bf16.mxu0 0
        %1983 = vmatmul.mubr.bf16.gmra.mrb[0].mxu0 %v1793
        %v1984 = vpop.f32.mrb[0].mxu0
        %v1985 = vadd.f32 %v1820, %v1984
        %v1986 = vpop.f32.mrb[0].mxu0
        %v1987 = vpop.f32.mrb[0].mxu0
        %v1988 = vadd.f32 %v1820, %v1987
        %v1989 = vpop.f32.mrb[0].mxu0
        %1990 = vmatprep.mubr.bf16.mxu0 0
        %1991 = vmatmul.mubr.bf16.gmra.mrb[0].mxu0 %v1794
        %v1992 = vpop.f32.mrb[0].mxu0
        %v1993 = vadd.f32 %v1820, %v1992
        %v1994 = vpop.f32.mrb[0].mxu0
        %v1995 = vpop.f32.mrb[0].mxu0
        %v1996 = vadd.f32 %v1820, %v1995
        %v1997 = vpop.f32.mrb[0].mxu0
        %1998 = vmatprep.mubr.bf16.mxu0 0
        %1999 = vmatmul.mubr.bf16.gmra.mrb[0].mxu0 %v1795
        %v2000 = vpop.f32.mrb[0].mxu0
        %v2001 = vadd.f32 %v1820, %v2000
        %v2002 = vpop.f32.mrb[0].mxu0
        %v2003 = vpop.f32.mrb[0].mxu0
        %v2004 = vadd.f32 %v1820, %v2003
        %v2005 = vpop.f32.mrb[0].mxu0
        %2006 = vmatprep.mubr.bf16.mxu0 0
        %2007 = vmatmul.mubr.bf16.gmra.mrb[0].mxu0 %v1796
        %v2008 = vpop.f32.mrb[0].mxu0
        %v2009 = vadd.f32 %v1820, %v2008
        %v2010 = vpop.f32.mrb[0].mxu0
        %v2011 = vpop.f32.mrb[0].mxu0
        %v2012 = vadd.f32 %v1820, %v2011
        %v2013 = vpop.f32.mrb[0].mxu0
        %2014 = vmatprep.mubr.bf16.mxu0 0
        %2015 = vmatmul.mubr.bf16.gmra.mrb[0].mxu0 %v1797
        %v2016 = vpop.f32.mrb[0].mxu0
        %v2017 = vadd.f32 %v1820, %v2016
        %v2018 = vpop.f32.mrb[0].mxu0
        %v2019 = vpop.f32.mrb[0].mxu0
        %v2020 = vadd.f32 %v1820, %v2019
        %v2021 = vpop.f32.mrb[0].mxu0
        %2022 = vmatprep.mubr.bf16.mxu0 0
        %2023 = vmatmul.mubr.bf16.gmra.mrb[0].mxu0 %v1798
        %v2024 = vpop.f32.mrb[0].mxu0
        %v2025 = vadd.f32 %v1820, %v2024
        %v2026 = vpop.f32.mrb[0].mxu0
        %v2027 = vpop.f32.mrb[0].mxu0
        %v2028 = vadd.f32 %v1820, %v2027
        %v2029 = vpop.f32.mrb[0].mxu0
        %2030 = vdwg.mxu0
        %v2031 = vmax.f32 %v1905, 0.0
        %v2032 = vmax.f32 %v1908, 0.0
        %v2033 = vmax.f32 %v1913, 0.0
        %v2034 = vmax.f32 %v1916, 0.0
        %v2035 = vmax.f32 %v1921, 0.0
        %v2036 = vmax.f32 %v1924, 0.0
        %v2037 = vmax.f32 %v1929, 0.0
        %v2038 = vmax.f32 %v1932, 0.0
        %v2039 = vmax.f32 %v1937, 0.0
        %v2040 = vmax.f32 %v1940, 0.0
        %v2041 = vmax.f32 %v1945, 0.0
        %v2042 = vmax.f32 %v1948, 0.0
        %v2043 = vmax.f32 %v1953, 0.0
        %v2044 = vmax.f32 %v1956, 0.0
        %v2045 = vmax.f32 %v1961, 0.0
        %v2046 = vmax.f32 %v1964, 0.0
        %v2047 = vmax.f32 %v1969, 0.0
        %v2048 = vmax.f32 %v1972, 0.0
        %v2049 = vmax.f32 %v1977, 0.0
        %v2050 = vmax.f32 %v1980, 0.0
        %v2051 = vmax.f32 %v1985, 0.0
        %v2052 = vmax.f32 %v1988, 0.0
        %v2053 = vmax.f32 %v1993, 0.0
        %v2054 = vmax.f32 %v1996, 0.0
        %v2055 = vmax.f32 %v2001, 0.0
        %v2056 = vmax.f32 %v2004, 0.0
        %v2057 = vmax.f32 %v2009, 0.0
        %v2058 = vmax.f32 %v2012, 0.0
        %v2059 = vmax.f32 %v2017, 0.0
        %v2060 = vmax.f32 %v2020, 0.0
        %v2061 = vmax.f32 %v2025, 0.0
        %v2062 = vmax.f32 %v2028, 0.0
        %v2063 = vpack.c.bf16 %v2032, %v2031
        %v2064 = vpack.c.bf16 %v2034, %v2033
        %v2065 = vpack.c.bf16 %v2036, %v2035
        %v2066 = vpack.c.bf16 %v2038, %v2037
        %v2067 = vpack.c.bf16 %v2040, %v2039
        %v2068 = vpack.c.bf16 %v2042, %v2041
        %v2069 = vpack.c.bf16 %v2044, %v2043
        %v2070 = vpack.c.bf16 %v2046, %v2045
        %v2071 = vpack.c.bf16 %v2048, %v2047
        %v2072 = vpack.c.bf16 %v2050, %v2049
        %v2073 = vpack.c.bf16 %v2052, %v2051
        %v2074 = vpack.c.bf16 %v2054, %v2053
        %v2075 = vpack.c.bf16 %v2056, %v2055
        %v2076 = vpack.c.bf16 %v2058, %v2057
        %v2077 = vpack.c.bf16 %v2060, %v2059
        %v2078 = vpack.c.bf16 %v2062, %v2061
        %v2079 = vld [vmem:[#allocation11] sm:$0xf]
        %v2080 = vld [vmem:[#allocation11 + $0x4] sm:$0xf]
        %v2081 = vld [vmem:[#allocation11 + $0x8] sm:$0xf]
        %v2082 = vld [vmem:[#allocation11 + $0xc] sm:$0xf]
        %v2083 = vld [vmem:[#allocation11 + $0x10] sm:$0xf]
        %v2084 = vld [vmem:[#allocation11 + $0x14] sm:$0xf]
        %v2085 = vld [vmem:[#allocation11 + $0x18] sm:$0xf]
        %v2086 = vld [vmem:[#allocation11 + $0x1c] sm:$0xf]
        %v2087 = vld [vmem:[#allocation11 + $0x20] sm:$0xf]
        %v2088 = vld [vmem:[#allocation11 + $0x24] sm:$0xf]
        %v2089 = vld [vmem:[#allocation11 + $0x28] sm:$0xf]
        %v2090 = vld [vmem:[#allocation11 + $0x2c] sm:$0xf]
        %v2091 = vld [vmem:[#allocation11 + $0x30] sm:$0xf]
        %v2092 = vld [vmem:[#allocation11 + $0x34] sm:$0xf]
        %v2093 = vld [vmem:[#allocation11 + $0x38] sm:$0xf]
        %v2094 = vld [vmem:[#allocation11 + $0x3c] sm:$0xf]
        %v2095 = vld [vmem:[%s8] sm:$0x1]
        %v2097 = vlaneseq
        %v2098 = vshrl.u32 %v2097, 7
        %v2099 = vsub.s32 0, %v2098
        %v2100 = vrot.slane %v2095, %v2099
        %v2118 = vunpack.c.l.b16 %v2079
        %v2119 = vunpack.c.l.b16 %v2080
        %v2120 = vunpack.c.l.b16 %v2081
        %v2121 = vunpack.c.l.b16 %v2082
        %v2122 = vunpack.c.l.b16 %v2083
        %v2123 = vunpack.c.l.b16 %v2084
        %v2124 = vunpack.c.l.b16 %v2085
        %v2125 = vunpack.c.l.b16 %v2086
        %v2126 = vunpack.c.l.b16 %v2087
        %v2127 = vunpack.c.l.b16 %v2088
        %v2128 = vunpack.c.l.b16 %v2089
        %v2129 = vunpack.c.l.b16 %v2090
        %v2130 = vunpack.c.l.b16 %v2091
        %v2131 = vunpack.c.l.b16 %v2092
        %v2132 = vunpack.c.l.b16 %v2093
        %v2133 = vunpack.c.l.b16 %v2094
        %v2134 = vpack.c.b16 %v2119, %v2118
        %v2135 = vpack.c.b16 %v2121, %v2120
        %v2136 = vpack.c.b16 %v2123, %v2122
        %v2137 = vpack.c.b16 %v2125, %v2124
        %v2138 = vpack.c.b16 %v2127, %v2126
        %v2139 = vpack.c.b16 %v2129, %v2128
        %v2140 = vpack.c.b16 %v2131, %v2130
        %v2141 = vpack.c.b16 %v2133, %v2132
        %2150 = vmatprep.subr.bf16.mxu0 0
        %2151 = vmatpush1.bf16.msra.mxu0 %v2134
        %2152 = vmatprep.subr.bf16.mxu0 0
        %2153 = vmatpush1.bf16.msra.mxu0 %v2135
        %2154 = vmatprep.subr.bf16.mxu0 0
        %2155 = vmatpush1.bf16.msra.mxu0 %v2136
        %2156 = vmatprep.subr.bf16.mxu0 0
        %2157 = vmatpush1.bf16.msra.mxu0 %v2137
        %2158 = vmatprep.subr.bf16.mxu0 0
        %2159 = vmatpush1.bf16.msra.mxu0 %v2138
        %2160 = vmatprep.subr.bf16.mxu0 0
        %2161 = vmatpush1.bf16.msra.mxu0 %v2139
        %2162 = vmatprep.subr.bf16.mxu0 0
        %2163 = vmatpush1.bf16.msra.mxu0 %v2140
        %2164 = vmatprep.subr.bf16.mxu0 0
        %2165 = vmatpush1.bf16.msra.mxu0 %v2141
        %2166 = vmatprep.subr.bf16.mxu0 0
        %2167 = vmatpush1.bf16.msra.mxu0 0
        %2168 = vmatprep.subr.bf16.mxu0 0
        %2169 = vmatpush1.bf16.msra.mxu0 0
        %2170 = vmatprep.subr.bf16.mxu0 0
        %2171 = vmatpush1.bf16.msra.mxu0 0
        %2172 = vmatprep.subr.bf16.mxu0 0
        %2173 = vmatpush1.bf16.msra.mxu0 0
        %2174 = vmatprep.subr.bf16.mxu0 0
        %2175 = vmatpush1.bf16.msra.mxu0 0
        %2176 = vmatprep.subr.bf16.mxu0 0
        %2177 = vmatpush1.bf16.msra.mxu0 0
        %2178 = vmatprep.subr.bf16.mxu0 0
        %2179 = vmatpush1.bf16.msra.mxu0 0
        %2180 = vmatprep.subr.bf16.mxu0 0
        %2181 = vmatpush1.bf16.msra.mxu0 0
        %2182 = vmatprep.mubr.bf16.mxu0 0
        %2183 = vmatmul.mubr.bf16.gmra.mrb[0].mxu0 %v2063
        %v2184 = vpop.f32.mrb[0].mxu0
        %v2185 = vadd.f32 %v2100, %v2184
        %v2186 = vpop.f32.mrb[0].mxu0
        %v2187 = vpop.f32.mrb[0].mxu0
        %v2188 = vadd.f32 %v2100, %v2187
        %v2189 = vpop.f32.mrb[0].mxu0
        %2190 = vmatprep.mubr.bf16.mxu0 0
        %2191 = vmatmul.mubr.bf16.gmra.mrb[0].mxu0 %v2064
        %v2192 = vpop.f32.mrb[0].mxu0
        %v2193 = vadd.f32 %v2100, %v2192
        %v2194 = vpop.f32.mrb[0].mxu0
        %v2195 = vpop.f32.mrb[0].mxu0
        %v2196 = vadd.f32 %v2100, %v2195
        %v2197 = vpop.f32.mrb[0].mxu0
        %2198 = vmatprep.mubr.bf16.mxu0 0
        %2199 = vmatmul.mubr.bf16.gmra.mrb[0].mxu0 %v2065
        %v2200 = vpop.f32.mrb[0].mxu0
        %v2201 = vadd.f32 %v2100, %v2200
        %v2202 = vpop.f32.mrb[0].mxu0
        %v2203 = vpop.f32.mrb[0].mxu0
        %v2204 = vadd.f32 %v2100, %v2203
        %v2205 = vpop.f32.mrb[0].mxu0
        %2206 = vmatprep.mubr.bf16.mxu0 0
        %2207 = vmatmul.mubr.bf16.gmra.mrb[0].mxu0 %v2066
        %v2208 = vpop.f32.mrb[0].mxu0
        %v2209 = vadd.f32 %v2100, %v2208
        %v2210 = vpop.f32.mrb[0].mxu0
        %v2211 = vpop.f32.mrb[0].mxu0
        %v2212 = vadd.f32 %v2100, %v2211
        %v2213 = vpop.f32.mrb[0].mxu0
        %2214 = vmatprep.mubr.bf16.mxu0 0
        %2215 = vmatmul.mubr.bf16.gmra.mrb[0].mxu0 %v2067
        %v2216 = vpop.f32.mrb[0].mxu0
        %v2217 = vadd.f32 %v2100, %v2216
        %v2218 = vpop.f32.mrb[0].mxu0
        %v2219 = vpop.f32.mrb[0].mxu0
        %v2220 = vadd.f32 %v2100, %v2219
        %v2221 = vpop.f32.mrb[0].mxu0
        %2222 = vmatprep.mubr.bf16.mxu0 0
        %2223 = vmatmul.mubr.bf16.gmra.mrb[0].mxu0 %v2068
        %v2224 = vpop.f32.mrb[0].mxu0
        %v2225 = vadd.f32 %v2100, %v2224
        %v2226 = vpop.f32.mrb[0].mxu0
        %v2227 = vpop.f32.mrb[0].mxu0
        %v2228 = vadd.f32 %v2100, %v2227
        %v2229 = vpop.f32.mrb[0].mxu0
        %2230 = vmatprep.mubr.bf16.mxu0 0
        %2231 = vmatmul.mubr.bf16.gmra.mrb[0].mxu0 %v2069
        %v2232 = vpop.f32.mrb[0].mxu0
        %v2233 = vadd.f32 %v2100, %v2232
        %v2234 = vpop.f32.mrb[0].mxu0
        %v2235 = vpop.f32.mrb[0].mxu0
        %v2236 = vadd.f32 %v2100, %v2235
        %v2237 = vpop.f32.mrb[0].mxu0
        %2238 = vmatprep.mubr.bf16.mxu0 0
        %2239 = vmatmul.mubr.bf16.gmra.mrb[0].mxu0 %v2070
        %v2240 = vpop.f32.mrb[0].mxu0
        %v2241 = vadd.f32 %v2100, %v2240
        %v2242 = vpop.f32.mrb[0].mxu0
        %v2243 = vpop.f32.mrb[0].mxu0
        %v2244 = vadd.f32 %v2100, %v2243
        %v2245 = vpop.f32.mrb[0].mxu0
        %2246 = vmatprep.mubr.bf16.mxu0 0
        %2247 = vmatmul.mubr.bf16.gmra.mrb[0].mxu0 %v2071
        %v2248 = vpop.f32.mrb[0].mxu0
        %v2249 = vadd.f32 %v2100, %v2248
        %v2250 = vpop.f32.mrb[0].mxu0
        %v2251 = vpop.f32.mrb[0].mxu0
        %v2252 = vadd.f32 %v2100, %v2251
        %v2253 = vpop.f32.mrb[0].mxu0
        %2254 = vmatprep.mubr.bf16.mxu0 0
        %2255 = vmatmul.mubr.bf16.gmra.mrb[0].mxu0 %v2072
        %v2256 = vpop.f32.mrb[0].mxu0
        %v2257 = vadd.f32 %v2100, %v2256
        %v2258 = vpop.f32.mrb[0].mxu0
        %v2259 = vpop.f32.mrb[0].mxu0
        %v2260 = vadd.f32 %v2100, %v2259
        %v2261 = vpop.f32.mrb[0].mxu0
        %2262 = vmatprep.mubr.bf16.mxu0 0
        %2263 = vmatmul.mubr.bf16.gmra.mrb[0].mxu0 %v2073
        %v2264 = vpop.f32.mrb[0].mxu0
        %v2265 = vadd.f32 %v2100, %v2264
        %v2266 = vpop.f32.mrb[0].mxu0
        %v2267 = vpop.f32.mrb[0].mxu0
        %v2268 = vadd.f32 %v2100, %v2267
        %v2269 = vpop.f32.mrb[0].mxu0
        %2270 = vmatprep.mubr.bf16.mxu0 0
        %2271 = vmatmul.mubr.bf16.gmra.mrb[0].mxu0 %v2074
        %v2272 = vpop.f32.mrb[0].mxu0
        %v2273 = vadd.f32 %v2100, %v2272
        %v2274 = vpop.f32.mrb[0].mxu0
        %v2275 = vpop.f32.mrb[0].mxu0
        %v2276 = vadd.f32 %v2100, %v2275
        %v2277 = vpop.f32.mrb[0].mxu0
        %2278 = vmatprep.mubr.bf16.mxu0 0
        %2279 = vmatmul.mubr.bf16.gmra.mrb[0].mxu0 %v2075
        %v2280 = vpop.f32.mrb[0].mxu0
        %v2281 = vadd.f32 %v2100, %v2280
        %v2282 = vpop.f32.mrb[0].mxu0
        %v2283 = vpop.f32.mrb[0].mxu0
        %v2284 = vadd.f32 %v2100, %v2283
        %v2285 = vpop.f32.mrb[0].mxu0
        %2286 = vmatprep.mubr.bf16.mxu0 0
        %2287 = vmatmul.mubr.bf16.gmra.mrb[0].mxu0 %v2076
        %v2288 = vpop.f32.mrb[0].mxu0
        %v2289 = vadd.f32 %v2100, %v2288
        %v2290 = vpop.f32.mrb[0].mxu0
        %v2291 = vpop.f32.mrb[0].mxu0
        %v2292 = vadd.f32 %v2100, %v2291
        %v2293 = vpop.f32.mrb[0].mxu0
        %2294 = vmatprep.mubr.bf16.mxu0 0
        %2295 = vmatmul.mubr.bf16.gmra.mrb[0].mxu0 %v2077
        %v2296 = vpop.f32.mrb[0].mxu0
        %v2297 = vadd.f32 %v2100, %v2296
        %v2298 = vpop.f32.mrb[0].mxu0
        %v2299 = vpop.f32.mrb[0].mxu0
        %v2300 = vadd.f32 %v2100, %v2299
        %v2301 = vpop.f32.mrb[0].mxu0
        %2302 = vmatprep.mubr.bf16.mxu0 0
        %2303 = vmatmul.mubr.bf16.gmra.mrb[0].mxu0 %v2078
        %v2304 = vpop.f32.mrb[0].mxu0
        %v2305 = vadd.f32 %v2100, %v2304
        %v2306 = vpop.f32.mrb[0].mxu0
        %v2307 = vpop.f32.mrb[0].mxu0
        %v2308 = vadd.f32 %v2100, %v2307
        %v2309 = vpop.f32.mrb[0].mxu0
        %2310 = vdwg.mxu0
        %v2311 = vadd.f32 %v2185, %v410
        %v2312 = vadd.f32 %v2188, %v411
        %v2313 = vadd.f32 %v2193, %v412
        %v2314 = vadd.f32 %v2196, %v413
        %v2315 = vadd.f32 %v2201, %v414
        %v2316 = vadd.f32 %v2204, %v415
        %v2317 = vadd.f32 %v2209, %v416
        %v2318 = vadd.f32 %v2212, %v417
        %v2319 = vadd.f32 %v2217, %v418
        %v2320 = vadd.f32 %v2220, %v419
        %v2321 = vadd.f32 %v2225, %v420
        %v2322 = vadd.f32 %v2228, %v421
        %v2323 = vadd.f32 %v2233, %v422
        %v2324 = vadd.f32 %v2236, %v423
        %v2325 = vadd.f32 %v2241, %v424
        %v2326 = vadd.f32 %v2244, %v425
        %v2327 = vadd.f32 %v2249, %v426
        %v2328 = vadd.f32 %v2252, %v427
        %v2329 = vadd.f32 %v2257, %v428
        %v2330 = vadd.f32 %v2260, %v429
        %v2331 = vadd.f32 %v2265, %v430
        %v2332 = vadd.f32 %v2268, %v431
        %v2333 = vadd.f32 %v2273, %v432
        %v2334 = vadd.f32 %v2276, %v433
        %v2335 = vadd.f32 %v2281, %v434
        %v2336 = vadd.f32 %v2284, %v435
        %v2337 = vadd.f32 %v2289, %v436
        %v2338 = vadd.f32 %v2292, %v437
        %v2339 = vadd.f32 %v2297, %v438
        %v2340 = vadd.f32 %v2300, %v439
        %v2341 = vadd.f32 %v2305, %v440
        %v2342 = vadd.f32 %v2308, %v441
        %2343 = vst [vmem:[%s408] sm:$0xff] %v2311
        %2344 = vst [vmem:[%s408 + $0x8] sm:$0xff] %v2312
        %2345 = vst [vmem:[%s408 + $0x10] sm:$0xff] %v2313
        %2346 = vst [vmem:[%s408 + $0x18] sm:$0xff] %v2314
        %2347 = vst [vmem:[%s408 + $0x20] sm:$0xff] %v2315
        %2348 = vst [vmem:[%s408 + $0x28] sm:$0xff] %v2316
        %2349 = vst [vmem:[%s408 + $0x30] sm:$0xff] %v2317
        %2350 = vst [vmem:[%s408 + $0x38] sm:$0xff] %v2318
        %2351 = vst [vmem:[%s408 + $0x40] sm:$0xff] %v2319
        %2352 = vst [vmem:[%s408 + $0x48] sm:$0xff] %v2320
        %2353 = vst [vmem:[%s408 + $0x50] sm:$0xff] %v2321
        %2354 = vst [vmem:[%s408 + $0x58] sm:$0xff] %v2322
        %2355 = vst [vmem:[%s408 + $0x60] sm:$0xff] %v2323
        %2356 = vst [vmem:[%s408 + $0x68] sm:$0xff] %v2324
        %2357 = vst [vmem:[%s408 + $0x70] sm:$0xff] %v2325
        %2358 = vst [vmem:[%s408 + $0x78] sm:$0xff] %v2326
        %2359 = vst [vmem:[%s408 + $0x80] sm:$0xff] %v2327
        %2360 = vst [vmem:[%s408 + $0x88] sm:$0xff] %v2328
        %2361 = vst [vmem:[%s408 + $0x90] sm:$0xff] %v2329
        %2362 = vst [vmem:[%s408 + $0x98] sm:$0xff] %v2330
        %2363 = vst [vmem:[%s408 + $0xa0] sm:$0xff] %v2331
        %2364 = vst [vmem:[%s408 + $0xa8] sm:$0xff] %v2332
        %2365 = vst [vmem:[%s408 + $0xb0] sm:$0xff] %v2333
        %2366 = vst [vmem:[%s408 + $0xb8] sm:$0xff] %v2334
        %2367 = vst [vmem:[%s408 + $0xc0] sm:$0xff] %v2335
        %2368 = vst [vmem:[%s408 + $0xc8] sm:$0xff] %v2336
        %2369 = vst [vmem:[%s408 + $0xd0] sm:$0xff] %v2337
        %2370 = vst [vmem:[%s408 + $0xd8] sm:$0xff] %v2338
        %2371 = vst [vmem:[%s408 + $0xe0] sm:$0xff] %v2339
        %2372 = vst [vmem:[%s408 + $0xe8] sm:$0xff] %v2340
        %2373 = vst [vmem:[%s408 + $0xf0] sm:$0xff] %v2341
        %2374 = vst [vmem:[%s408 + $0xf8] sm:$0xff] %v2342
        %s2375 = sand.u32 %s230, 1
        %s2376 = scalar_lea.sflag [#allocation5], %s2375
        %s2377 = sand.u32 %s230, 1
        %s2378 = smul.addr %s2377, 256
        %s2379 = scalar_lea.vmem [#allocation12], %s2378
        // Predicated region
        $region77: #{tpu_custom_call.1} parent=55 // pred_check
          %p2380 = pneg %p240
        $region78: #{tpu_custom_call.1} parent=55 // pred_check_branch
          %2382 = sbr.rel (%p2380) target = $region80
        $region79: #{tpu_custom_call.1} parent=55 // pred_region
          %s2384 = ssub.s32 4096, 4096
          %2385 = vsyncadd %s2376, %s2384
          %s2386 = smul.addr %s28, 32
          %s2387 = smul.addr %s2386, 128
          %s2388 = scalar_lea.hbm %s9, %s2387
          %s2389 = sshll.u32 %s2379, 4
          %s2390 = int_to_ptr.vmem [resolvable:$true] %s2389
          %2395 = dma.vmem_to_hbm [thread:$0]  %s2390, 4096, %s2388, %s2376, 128, 128, 8
        $region80: #{tpu_custom_call.1} parent=55 // pred_fallthru
          _
      $region56: #{tpu_custom_call.1} parent=5 // pred_fallthru
        _
      %p2396 = scmp.le.s32.totalorder 2, %s23
      // Predicated region
      $region81: #{tpu_custom_call.1} parent=5 // pred_check
        %p2397 = pneg %p2396
      $region82: #{tpu_custom_call.1} parent=5 // pred_check_branch
        %2399 = sbr.rel (%p2397) target = $region84
      $region83: #{tpu_custom_call.1} parent=5 // pred_region
        %s2400 = ssub.s32 %s23, 2
        // Predicated region
        $region85: #{tpu_custom_call.1} parent=83 // pred_check
          %p2401 = pneg %p246
        $region86: #{tpu_custom_call.1} parent=83 // pred_check_branch
          %2403 = sbr.rel (%p2401) target = $region88
        $region87: #{tpu_custom_call.1} parent=83 // pred_region
          %s2404 = sand.u32 %s231, 1
          %s2405 = scalar_lea.sflag [#allocation5], %s2404
          %s2406 = sand.u32 %s231, 1
          %s2407 = smul.addr %s2406, 256
          %s2408 = scalar_lea.vmem [#allocation12], %s2407
          %2409 = dma.done %s2405, 4096
        $region88: #{tpu_custom_call.1} parent=83 // pred_fallthru
          _
      $region84: #{tpu_custom_call.1} parent=5 // pred_fallthru
        _
    $region6: #{tpu_custom_call.1} parent=1 // loop_footer
      %s27 = sadd.s32 1, %s23
    $region7: #{tpu_custom_call.1} parent=1 // loop_footer_branch
      %22 = sbr.rel target = $region3
    $region8: #{tpu_custom_call.1} parent=1 // loop_exit
      _
    %2410 = vsyncpa [#allocation4], 1
    %s2411 = scalar_lea.sflag [#allocation4], 1
    %2412 = vsyncpa %s2411, 1
    %2413 = vsyncpa [#allocation7], 1
    %2414 = vsyncpa [#allocation10], 1
    %2415 = vsyncpa [#allocation5], 1
    %s2416 = scalar_lea.sflag [#allocation5], 1
    %2417 = vsyncpa %s2416, 1

</llo_original>
